<compile_context>
chip_gen: v7x
topology: tpu7x:2x2x1
jax: 0.10.0
libtpu: 0.0.40
codegen_flags: <defaults>
</compile_context>

<pallas_src>
import math
from functools import partial

import jax
import jax.numpy as jnp
from jax import lax
from jax.experimental import pallas as pl
from jax.experimental.pallas import tpu as pltpu


def _round_up(x, m):
    return ((x + m - 1) // m) * m


def dtjscc_mnist_kernel(
    x_ref,                       # (Bt, 784)      bf16
    w_score_ref, b_score_ref,    # (784, N*E) bf16, (1, N*E) f32   (scale folded in)
    w1hat_ref, b1_ref,           # (N*E, 1024) bf16, (1, 1024) f32
    w2_ref, b2_ref,              # (1024, 256) bf16, (1, 256)  f32
    w3_ref, b3_ref,              # (256, Cp)   bf16, (1, Cp)   f32 (Cp = padded classes)
    logits_ref,                  # out: (Bt, Cp)  f32
    dist_ref,                    # out: (Bt, N*E) f32 (lane-packed)
    *, num_latent, num_embeddings,
):
    N, E = num_latent, num_embeddings

    # ---- fused encoder + codebook scoring: one K=784 bf16 MXU matmul ----
    score = jnp.dot(x_ref[...], w_score_ref[...],
                    preferred_element_type=jnp.float32) + b_score_ref[...]

    # ---- per-latent softmax + argmax one-hot on the VPU (unrolled over N) ----
    dist_parts = []
    onehot_parts = []
    for n in range(N):
        s = score[:, n * E:(n + 1) * E]                      # (Bt, E) static slice
        m = jnp.max(s, axis=-1, keepdims=True)
        e = jnp.exp(s - m)
        dist_parts.append(e / jnp.sum(e, axis=-1, keepdims=True))
        iota = lax.broadcasted_iota(jnp.int32, s.shape, 1)
        first = jnp.min(jnp.where(s >= m, iota, E), axis=-1, keepdims=True)
        onehot_parts.append((iota == first).astype(jnp.float32))

    dist_ref[...] = jnp.concatenate(dist_parts, axis=-1)     # lane-dense store
    onehot = jnp.concatenate(onehot_parts, axis=-1)          # (Bt, N*E)

    # ---- decoder MLP: 16 -> 1024 -> ReLU -> 256 -> ReLU -> Cp (bf16 MXU) ----
    h1 = jnp.dot(onehot.astype(jnp.bfloat16), w1hat_ref[...],
                 preferred_element_type=jnp.float32) + b1_ref[...]
    h1 = jnp.maximum(h1, 0.0).astype(jnp.bfloat16)
    h2 = jnp.dot(h1, w2_ref[...], preferred_element_type=jnp.float32) + b2_ref[...]
    h2 = jnp.maximum(h2, 0.0).astype(jnp.bfloat16)
    logits_ref[...] = jnp.dot(h2, w3_ref[...],
                              preferred_element_type=jnp.float32) + b3_ref[...]


def init_params(key, latent_d, num_latent, num_embeddings, out_classes):
    ks = jax.random.split(key, 5)

    def linear(k, fan_in, fan_out):
        bound = 1.0 / math.sqrt(fan_in)
        kw, kb = jax.random.split(k)
        w = jax.random.uniform(kw, (fan_in, fan_out), jnp.float32, -bound, bound)
        b = jax.random.uniform(kb, (1, fan_out), jnp.float32, -bound, bound)
        return w, b

    w_enc, b_enc = linear(ks[0], 28 * 28, latent_d * num_latent)
    emb = jax.random.uniform(
        ks[1], (num_embeddings, latent_d), jnp.float32,
        -1.0 / num_embeddings, 1.0 / num_embeddings)
    w1, b1 = linear(ks[2], latent_d * num_latent, 1024)
    w2, b2 = linear(ks[3], 1024, 256)
    w3, b3 = linear(ks[4], 256, out_classes)
    return dict(w_enc=w_enc, b_enc=b_enc, emb=emb,
                w1=w1, b1=b1, w2=w2, b2=b2, w3=w3, b3=b3)


def dtjscc_mnist_forward(X, params, *, latent_d, num_latent, num_embeddings,
                         out_classes, block_rows=512):
    B = X.shape[0]
    L, N, E, C = latent_d, num_latent, num_embeddings, out_classes
    NE = N * E

    x = X.reshape(B, -1).astype(jnp.float32)                 # nn.Flatten on NCHW

    # ---- one-time algebraic fusion of encoder + codebook (wrapper side) ----
    emb = params["emb"]                                      # (E, L)
    scale = 1.0 / math.sqrt(L)
    w_enc = params["w_enc"].reshape(28 * 28, N, L)
    w_score = (jnp.einsum("knl,el->kne", w_enc, emb) * scale).reshape(28 * 28, NE)
    b_enc = params["b_enc"].reshape(N, L)
    b_score = (jnp.einsum("nl,el->ne", b_enc, emb) * scale).reshape(1, NE)

    w1 = params["w1"].reshape(N, L, 1024)
    w1hat = jnp.einsum("el,nlh->neh", emb, w1).reshape(NE, 1024)

    # pad logits lane dim to a multiple of 128 -> unmasked stores, full MXU tile
    C_pad = max(128, _round_up(C, 128))
    w3p = jnp.zeros((256, C_pad), jnp.float32).at[:, :C].set(params["w3"])
    b3p = jnp.zeros((1, C_pad), jnp.float32).at[:, :C].set(params["b3"])

    # ---- batch tiling (grid over rows, sized to fit v7x / v6e / v5e VMEM) ----
    b_tile = min(_round_up(block_rows, 16), _round_up(B, 16))
    padded_B = _round_up(B, b_tile)
    if padded_B != B:
        x = jnp.pad(x, ((0, padded_B - B), (0, 0)))

    # bf16 operands for the MXU (f32 accumulation happens inside the kernel)
    x_bf = x.astype(jnp.bfloat16)
    w_score_bf = w_score.astype(jnp.bfloat16)
    w1hat_bf = w1hat.astype(jnp.bfloat16)
    w2_bf = params["w2"].astype(jnp.bfloat16)
    w3_bf = w3p.astype(jnp.bfloat16)

    kern = partial(dtjscc_mnist_kernel, num_latent=N, num_embeddings=E)
    grid = (padded_B // b_tile,)

    weight_bytes = 2 * (28 * 28 * NE + NE * 1024 + 1024 * 256 + 256 * C_pad) \
        + 4 * (NE + 1024 + 256 + C_pad)
    cost = pl.CostEstimate(
        flops=2 * padded_B * (28 * 28 * NE + NE * 1024 + 1024 * 256 + 256 * C_pad),
        transcendentals=padded_B * NE,
        bytes_accessed=padded_B * 28 * 28 * 2 + weight_bytes
        + padded_B * (C_pad + NE) * 4,
    )

    resident = lambda shape: pl.BlockSpec(shape, lambda i: (0, 0))
    logits_pad, dist_pack = pl.pallas_call(
        kern,
        out_shape=(
            jax.ShapeDtypeStruct((padded_B, C_pad), jnp.float32),
            jax.ShapeDtypeStruct((padded_B, NE), jnp.float32),
        ),
        grid=grid,
        in_specs=[
            pl.BlockSpec((b_tile, 28 * 28), lambda i: (i, 0)),   # x (pipelined)
            resident((28 * 28, NE)),                             # W_score
            resident((1, NE)),                                   # b_score
            resident((NE, 1024)),                                # W1hat
            resident((1, 1024)),                                 # b1
            resident((1024, 256)),                               # w2
            resident((1, 256)),                                  # b2
            resident((256, C_pad)),                              # w3 (padded)
            resident((1, C_pad)),                                # b3 (padded)
        ],
        out_specs=(
            pl.BlockSpec((b_tile, C_pad), lambda i: (i, 0)),     # logits (padded)
            pl.BlockSpec((b_tile, NE), lambda i: (i, 0)),        # dist (lane-packed)
        ),
        compiler_params=pltpu.CompilerParams(
            dimension_semantics=("parallel",)),
        cost_estimate=cost,
    )(x_bf, w_score_bf, b_score, w1hat_bf, params["b1"], w2_bf, params["b2"],
      w3_bf, b3p)

    logits = logits_pad[:B, :C]
    dist = dist_pack[:B].reshape(B * N, E)
    return logits, dist


if __name__ == "__main__":
    latent_channels = 4
    num_latent = 4
    num_embeddings = 4
    out_classes = 10
    batch = 2

    key = jax.random.PRNGKey(0)
    k_x, k_p = jax.random.split(key)
    X = jax.random.normal(k_x, (batch, 1, 28, 28), dtype=jnp.float32)  # NCHW MNIST
    params = init_params(k_p, latent_channels, num_latent, num_embeddings, out_classes)

    logits, dist = dtjscc_mnist_forward(
        X, params,
        latent_d=latent_channels, num_latent=num_latent,
        num_embeddings=num_embeddings, out_classes=out_classes)
    jax.block_until_ready((logits, dist))

    assert logits.shape == (batch, out_classes)
    assert dist.shape == (batch * num_latent, num_embeddings)
    assert bool(jnp.all(jnp.isfinite(logits))) and bool(jnp.all(jnp.isfinite(dist)))
    print("KERNEL_OK")
</pallas_src>

<mosaic_0001>
module attributes {stable_mosaic.version = 11 : i64} {
  func.func @dtjscc_mnist_kernel(%arg0: i32, %arg1: memref<16x784xbf16, #tpu.memory_space<vmem>>, %arg2: memref<784x16xbf16, #tpu.memory_space<vmem>>, %arg3: memref<1x16xf32, #tpu.memory_space<vmem>>, %arg4: memref<16x1024xbf16, #tpu.memory_space<vmem>>, %arg5: memref<1x1024xf32, #tpu.memory_space<vmem>>, %arg6: memref<1024x256xbf16, #tpu.memory_space<vmem>>, %arg7: memref<1x256xf32, #tpu.memory_space<vmem>>, %arg8: memref<256x128xbf16, #tpu.memory_space<vmem>>, %arg9: memref<1x128xf32, #tpu.memory_space<vmem>>, %arg10: memref<16x128xf32, #tpu.memory_space<vmem>>, %arg11: memref<16x16xf32, #tpu.memory_space<vmem>>) attributes {dimension_semantics = [#tpu.dimension_semantics<parallel>], iteration_bounds = array<i64: 1>, scalar_prefetch = 0 : i64, scratch_operands = 0 : i64, tpu.core_type = #tpu.core_type<tc>, window_params = [{transform_indices = @transform_0, window_bounds = array<i64: 16, 784>}, {pipeline_mode = #tpu.pipeline_mode<synchronous>, transform_indices = @transform_1, window_bounds = array<i64: 784, 16>}, {pipeline_mode = #tpu.pipeline_mode<synchronous>, transform_indices = @transform_2, window_bounds = array<i64: 1, 16>}, {pipeline_mode = #tpu.pipeline_mode<synchronous>, transform_indices = @transform_3, window_bounds = array<i64: 16, 1024>}, {pipeline_mode = #tpu.pipeline_mode<synchronous>, transform_indices = @transform_4, window_bounds = array<i64: 1, 1024>}, {pipeline_mode = #tpu.pipeline_mode<synchronous>, transform_indices = @transform_5, window_bounds = array<i64: 1024, 256>}, {pipeline_mode = #tpu.pipeline_mode<synchronous>, transform_indices = @transform_6, window_bounds = array<i64: 1, 256>}, {pipeline_mode = #tpu.pipeline_mode<synchronous>, transform_indices = @transform_7, window_bounds = array<i64: 256, 128>}, {pipeline_mode = #tpu.pipeline_mode<synchronous>, transform_indices = @transform_8, window_bounds = array<i64: 1, 128>}, {transform_indices = @transform_9, window_bounds = array<i64: 16, 128>}, {transform_indices = @transform_10, window_bounds = array<i64: 16, 16>}]} {
    %c0 = arith.constant 0 : index
    %c0_0 = arith.constant 0 : index
    %0 = vector.load %arg1[%c0, %c0_0] : memref<16x784xbf16, #tpu.memory_space<vmem>>, vector<16x784xbf16>
    %c0_1 = arith.constant 0 : index
    %c0_2 = arith.constant 0 : index
    %1 = vector.load %arg2[%c0_1, %c0_2] : memref<784x16xbf16, #tpu.memory_space<vmem>>, vector<784x16xbf16>
    %cst = arith.constant dense<0.000000e+00> : vector<16x16xf32>
    %2 = tpu.matmul %0, %1, %cst {dimension_numbers = #tpu.dot_dimension_numbers<[1], [0], [0], [1], [0, 0, 1, 1], [], []>} : vector<16x784xbf16>, vector<784x16xbf16>, vector<16x16xf32> -> vector<16x16xf32>
    %c0_3 = arith.constant 0 : index
    %c0_4 = arith.constant 0 : index
    %3 = vector.load %arg3[%c0_3, %c0_4] : memref<1x16xf32, #tpu.memory_space<vmem>>, vector<1x16xf32>
    %4 = vector.broadcast %3 : vector<1x16xf32> to vector<16x16xf32>
    %5 = arith.addf %2, %4 : vector<16x16xf32>
    %6 = vector.extract_strided_slice %5 {offsets = [0, 0], sizes = [16, 4], strides = [1, 1]} : vector<16x16xf32> to vector<16x4xf32>
    %cst_5 = arith.constant dense<0xFF800000> : vector<16xf32>
    %7 = vector.multi_reduction <maximumf>, %6, %cst_5 [1] : vector<16x4xf32> to vector<16xf32>
    %8 = vector.shape_cast %7 : vector<16xf32> to vector<16x1xf32>
    %9 = vector.broadcast %8 : vector<16x1xf32> to vector<16x4xf32>
    %10 = arith.subf %6, %9 : vector<16x4xf32>
    %11 = math.exp %10 : vector<16x4xf32>
    %cst_6 = arith.constant dense<0.000000e+00> : vector<16xf32>
    %12 = vector.multi_reduction <add>, %11, %cst_6 [1] : vector<16x4xf32> to vector<16xf32>
    %13 = vector.shape_cast %12 : vector<16xf32> to vector<16x1xf32>
    %14 = vector.broadcast %13 : vector<16x1xf32> to vector<16x4xf32>
    %15 = arith.divf %11, %14 : vector<16x4xf32>
    %16 = tpu.iota {dimensions = array<i32: 1>} : vector<16x4xi32>
    %17 = vector.broadcast %8 : vector<16x1xf32> to vector<16x4xf32>
    %18 = arith.cmpf oge, %6, %17 : vector<16x4xf32>
    %c4_i32 = arith.constant 4 : i32
    %19 = vector.broadcast %c4_i32 : i32 to vector<16x4xi32>
    %20 = arith.select %18, %16, %19 : vector<16x4xi1>, vector<16x4xi32>
    %cst_7 = arith.constant dense<2147483647> : vector<16xi32>
    %21 = vector.multi_reduction <minsi>, %20, %cst_7 [1] : vector<16x4xi32> to vector<16xi32>
    %22 = vector.shape_cast %21 : vector<16xi32> to vector<16x1xi32>
    %23 = vector.broadcast %22 : vector<16x1xi32> to vector<16x4xi32>
    %24 = arith.cmpi eq, %16, %23 : vector<16x4xi32>
    %25 = arith.extui %24 : vector<16x4xi1> to vector<16x4xi32>
    %26 = arith.sitofp %25 : vector<16x4xi32> to vector<16x4xf32>
    %27 = vector.extract_strided_slice %5 {offsets = [0, 4], sizes = [16, 4], strides = [1, 1]} : vector<16x16xf32> to vector<16x4xf32>
    %cst_8 = arith.constant dense<0xFF800000> : vector<16xf32>
    %28 = vector.multi_reduction <maximumf>, %27, %cst_8 [1] : vector<16x4xf32> to vector<16xf32>
    %29 = vector.shape_cast %28 : vector<16xf32> to vector<16x1xf32>
    %30 = vector.broadcast %29 : vector<16x1xf32> to vector<16x4xf32>
    %31 = arith.subf %27, %30 : vector<16x4xf32>
    %32 = math.exp %31 : vector<16x4xf32>
    %cst_9 = arith.constant dense<0.000000e+00> : vector<16xf32>
    %33 = vector.multi_reduction <add>, %32, %cst_9 [1] : vector<16x4xf32> to vector<16xf32>
    %34 = vector.shape_cast %33 : vector<16xf32> to vector<16x1xf32>
    %35 = vector.broadcast %34 : vector<16x1xf32> to vector<16x4xf32>
    %36 = arith.divf %32, %35 : vector<16x4xf32>
    %37 = tpu.iota {dimensions = array<i32: 1>} : vector<16x4xi32>
    %38 = vector.broadcast %29 : vector<16x1xf32> to vector<16x4xf32>
    %39 = arith.cmpf oge, %27, %38 : vector<16x4xf32>
    %c4_i32_10 = arith.constant 4 : i32
    %40 = vector.broadcast %c4_i32_10 : i32 to vector<16x4xi32>
    %41 = arith.select %39, %37, %40 : vector<16x4xi1>, vector<16x4xi32>
    %cst_11 = arith.constant dense<2147483647> : vector<16xi32>
    %42 = vector.multi_reduction <minsi>, %41, %cst_11 [1] : vector<16x4xi32> to vector<16xi32>
    %43 = vector.shape_cast %42 : vector<16xi32> to vector<16x1xi32>
    %44 = vector.broadcast %43 : vector<16x1xi32> to vector<16x4xi32>
    %45 = arith.cmpi eq, %37, %44 : vector<16x4xi32>
    %46 = arith.extui %45 : vector<16x4xi1> to vector<16x4xi32>
    %47 = arith.sitofp %46 : vector<16x4xi32> to vector<16x4xf32>
    %48 = vector.extract_strided_slice %5 {offsets = [0, 8], sizes = [16, 4], strides = [1, 1]} : vector<16x16xf32> to vector<16x4xf32>
    %cst_12 = arith.constant dense<0xFF800000> : vector<16xf32>
    %49 = vector.multi_reduction <maximumf>, %48, %cst_12 [1] : vector<16x4xf32> to vector<16xf32>
    %50 = vector.shape_cast %49 : vector<16xf32> to vector<16x1xf32>
    %51 = vector.broadcast %50 : vector<16x1xf32> to vector<16x4xf32>
    %52 = arith.subf %48, %51 : vector<16x4xf32>
    %53 = math.exp %52 : vector<16x4xf32>
    %cst_13 = arith.constant dense<0.000000e+00> : vector<16xf32>
    %54 = vector.multi_reduction <add>, %53, %cst_13 [1] : vector<16x4xf32> to vector<16xf32>
    %55 = vector.shape_cast %54 : vector<16xf32> to vector<16x1xf32>
    %56 = vector.broadcast %55 : vector<16x1xf32> to vector<16x4xf32>
    %57 = arith.divf %53, %56 : vector<16x4xf32>
    %58 = tpu.iota {dimensions = array<i32: 1>} : vector<16x4xi32>
    %59 = vector.broadcast %50 : vector<16x1xf32> to vector<16x4xf32>
    %60 = arith.cmpf oge, %48, %59 : vector<16x4xf32>
    %c4_i32_14 = arith.constant 4 : i32
    %61 = vector.broadcast %c4_i32_14 : i32 to vector<16x4xi32>
    %62 = arith.select %60, %58, %61 : vector<16x4xi1>, vector<16x4xi32>
    %cst_15 = arith.constant dense<2147483647> : vector<16xi32>
    %63 = vector.multi_reduction <minsi>, %62, %cst_15 [1] : vector<16x4xi32> to vector<16xi32>
    %64 = vector.shape_cast %63 : vector<16xi32> to vector<16x1xi32>
    %65 = vector.broadcast %64 : vector<16x1xi32> to vector<16x4xi32>
    %66 = arith.cmpi eq, %58, %65 : vector<16x4xi32>
    %67 = arith.extui %66 : vector<16x4xi1> to vector<16x4xi32>
    %68 = arith.sitofp %67 : vector<16x4xi32> to vector<16x4xf32>
    %69 = vector.extract_strided_slice %5 {offsets = [0, 12], sizes = [16, 4], strides = [1, 1]} : vector<16x16xf32> to vector<16x4xf32>
    %cst_16 = arith.constant dense<0xFF800000> : vector<16xf32>
    %70 = vector.multi_reduction <maximumf>, %69, %cst_16 [1] : vector<16x4xf32> to vector<16xf32>
    %71 = vector.shape_cast %70 : vector<16xf32> to vector<16x1xf32>
    %72 = vector.broadcast %71 : vector<16x1xf32> to vector<16x4xf32>
    %73 = arith.subf %69, %72 : vector<16x4xf32>
    %74 = math.exp %73 : vector<16x4xf32>
    %cst_17 = arith.constant dense<0.000000e+00> : vector<16xf32>
    %75 = vector.multi_reduction <add>, %74, %cst_17 [1] : vector<16x4xf32> to vector<16xf32>
    %76 = vector.shape_cast %75 : vector<16xf32> to vector<16x1xf32>
    %77 = vector.broadcast %76 : vector<16x1xf32> to vector<16x4xf32>
    %78 = arith.divf %74, %77 : vector<16x4xf32>
    %79 = tpu.iota {dimensions = array<i32: 1>} : vector<16x4xi32>
    %80 = vector.broadcast %71 : vector<16x1xf32> to vector<16x4xf32>
    %81 = arith.cmpf oge, %69, %80 : vector<16x4xf32>
    %c4_i32_18 = arith.constant 4 : i32
    %82 = vector.broadcast %c4_i32_18 : i32 to vector<16x4xi32>
    %83 = arith.select %81, %79, %82 : vector<16x4xi1>, vector<16x4xi32>
    %cst_19 = arith.constant dense<2147483647> : vector<16xi32>
    %84 = vector.multi_reduction <minsi>, %83, %cst_19 [1] : vector<16x4xi32> to vector<16xi32>
    %85 = vector.shape_cast %84 : vector<16xi32> to vector<16x1xi32>
    %86 = vector.broadcast %85 : vector<16x1xi32> to vector<16x4xi32>
    %87 = arith.cmpi eq, %79, %86 : vector<16x4xi32>
    %88 = arith.extui %87 : vector<16x4xi1> to vector<16x4xi32>
    %89 = arith.sitofp %88 : vector<16x4xi32> to vector<16x4xf32>
    %90 = tpu.concatenate %15, %36, %57, %78 in 1 : vector<16x4xf32>, vector<16x4xf32>, vector<16x4xf32>, vector<16x4xf32> -> vector<16x16xf32>
    %c0_20 = arith.constant 0 : index
    %c0_21 = arith.constant 0 : index
    %91 = vector.load %arg11[%c0_20, %c0_21] : memref<16x16xf32, #tpu.memory_space<vmem>>, vector<16x16xf32>
    tpu.vector_store %arg11[%c0_20, %c0_21], %90 {strides = array<i32>} : memref<16x16xf32, #tpu.memory_space<vmem>>, vector<16x16xf32>,
    %92 = tpu.concatenate %26, %47, %68, %89 in 1 : vector<16x4xf32>, vector<16x4xf32>, vector<16x4xf32>, vector<16x4xf32> -> vector<16x16xf32>
    %93 = arith.truncf %92 : vector<16x16xf32> to vector<16x16xbf16>
    %c0_22 = arith.constant 0 : index
    %c0_23 = arith.constant 0 : index
    %94 = vector.load %arg4[%c0_22, %c0_23] : memref<16x1024xbf16, #tpu.memory_space<vmem>>, vector<16x1024xbf16>
    %cst_24 = arith.constant dense<0.000000e+00> : vector<16x1024xf32>
    %95 = tpu.matmul %93, %94, %cst_24 {dimension_numbers = #tpu.dot_dimension_numbers<[1], [0], [0], [1], [0, 0, 1, 1], [], []>} : vector<16x16xbf16>, vector<16x1024xbf16>, vector<16x1024xf32> -> vector<16x1024xf32>
    %c0_25 = arith.constant 0 : index
    %c0_26 = arith.constant 0 : index
    %96 = vector.load %arg5[%c0_25, %c0_26] : memref<1x1024xf32, #tpu.memory_space<vmem>>, vector<1x1024xf32>
    %97 = vector.broadcast %96 : vector<1x1024xf32> to vector<16x1024xf32>
    %98 = arith.addf %95, %97 : vector<16x1024xf32>
    %cst_27 = arith.constant 0.000000e+00 : f32
    %99 = vector.broadcast %cst_27 : f32 to vector<16x1024xf32>
    %100 = arith.maximumf %98, %99 : vector<16x1024xf32>
    %101 = arith.truncf %100 : vector<16x1024xf32> to vector<16x1024xbf16>
    %c0_28 = arith.constant 0 : index
    %c0_29 = arith.constant 0 : index
    %102 = vector.load %arg6[%c0_28, %c0_29] : memref<1024x256xbf16, #tpu.memory_space<vmem>>, vector<1024x256xbf16>
    %cst_30 = arith.constant dense<0.000000e+00> : vector<16x256xf32>
    %103 = tpu.matmul %101, %102, %cst_30 {dimension_numbers = #tpu.dot_dimension_numbers<[1], [0], [0], [1], [0, 0, 1, 1], [], []>} : vector<16x1024xbf16>, vector<1024x256xbf16>, vector<16x256xf32> -> vector<16x256xf32>
    %c0_31 = arith.constant 0 : index
    %c0_32 = arith.constant 0 : index
    %104 = vector.load %arg7[%c0_31, %c0_32] : memref<1x256xf32, #tpu.memory_space<vmem>>, vector<1x256xf32>
    %105 = vector.broadcast %104 : vector<1x256xf32> to vector<16x256xf32>
    %106 = arith.addf %103, %105 : vector<16x256xf32>
    %cst_33 = arith.constant 0.000000e+00 : f32
    %107 = vector.broadcast %cst_33 : f32 to vector<16x256xf32>
    %108 = arith.maximumf %106, %107 : vector<16x256xf32>
    %109 = arith.truncf %108 : vector<16x256xf32> to vector<16x256xbf16>
    %c0_34 = arith.constant 0 : index
    %c0_35 = arith.constant 0 : index
    %110 = vector.load %arg8[%c0_34, %c0_35] : memref<256x128xbf16, #tpu.memory_space<vmem>>, vector<256x128xbf16>
    %cst_36 = arith.constant dense<0.000000e+00> : vector<16x128xf32>
    %111 = tpu.matmul %109, %110, %cst_36 {dimension_numbers = #tpu.dot_dimension_numbers<[1], [0], [0], [1], [0, 0, 1, 1], [], []>} : vector<16x256xbf16>, vector<256x128xbf16>, vector<16x128xf32> -> vector<16x128xf32>
    %c0_37 = arith.constant 0 : index
    %c0_38 = arith.constant 0 : index
    %112 = vector.load %arg9[%c0_37, %c0_38] : memref<1x128xf32, #tpu.memory_space<vmem>>, vector<1x128xf32>
    %113 = vector.broadcast %112 : vector<1x128xf32> to vector<16x128xf32>
    %114 = arith.addf %111, %113 : vector<16x128xf32>
    %c0_39 = arith.constant 0 : index
    %c0_40 = arith.constant 0 : index
    %115 = vector.load %arg10[%c0_39, %c0_40] : memref<16x128xf32, #tpu.memory_space<vmem>>, vector<16x128xf32>
    tpu.vector_store %arg10[%c0_39, %c0_40], %114 {strides = array<i32>} : memref<16x128xf32, #tpu.memory_space<vmem>>, vector<16x128xf32>,
    return
  }
  func.func @transform_0(%arg0: i32) -> (i32, i32) {
    %c0_i32 = arith.constant 0 : i32
    %c0_i32_0 = arith.constant 0 : i32
    return %arg0, %c0_i32 : i32, i32
  }
  func.func @transform_1(%arg0: i32) -> (i32, i32) {
    %c0_i32 = arith.constant 0 : i32
    %c0_i32_0 = arith.constant 0 : i32
    %c0_i32_1 = arith.constant 0 : i32
    return %c0_i32, %c0_i32_0 : i32, i32
  }
  func.func @transform_2(%arg0: i32) -> (i32, i32) {
    %c0_i32 = arith.constant 0 : i32
    %c0_i32_0 = arith.constant 0 : i32
    %c0_i32_1 = arith.constant 0 : i32
    return %c0_i32, %c0_i32_0 : i32, i32
  }
  func.func @transform_3(%arg0: i32) -> (i32, i32) {
    %c0_i32 = arith.constant 0 : i32
    %c0_i32_0 = arith.constant 0 : i32
    %c0_i32_1 = arith.constant 0 : i32
    return %c0_i32, %c0_i32_0 : i32, i32
  }
  func.func @transform_4(%arg0: i32) -> (i32, i32) {
    %c0_i32 = arith.constant 0 : i32
    %c0_i32_0 = arith.constant 0 : i32
    %c0_i32_1 = arith.constant 0 : i32
    return %c0_i32, %c0_i32_0 : i32, i32
  }
  func.func @transform_5(%arg0: i32) -> (i32, i32) {
    %c0_i32 = arith.constant 0 : i32
    %c0_i32_0 = arith.constant 0 : i32
    %c0_i32_1 = arith.constant 0 : i32
    return %c0_i32, %c0_i32_0 : i32, i32
  }
  func.func @transform_6(%arg0: i32) -> (i32, i32) {
    %c0_i32 = arith.constant 0 : i32
    %c0_i32_0 = arith.constant 0 : i32
    %c0_i32_1 = arith.constant 0 : i32
    return %c0_i32, %c0_i32_0 : i32, i32
  }
  func.func @transform_7(%arg0: i32) -> (i32, i32) {
    %c0_i32 = arith.constant 0 : i32
    %c0_i32_0 = arith.constant 0 : i32
    %c0_i32_1 = arith.constant 0 : i32
    return %c0_i32, %c0_i32_0 : i32, i32
  }
  func.func @transform_8(%arg0: i32) -> (i32, i32) {
    %c0_i32 = arith.constant 0 : i32
    %c0_i32_0 = arith.constant 0 : i32
    %c0_i32_1 = arith.constant 0 : i32
    return %c0_i32, %c0_i32_0 : i32, i32
  }
  func.func @transform_9(%arg0: i32) -> (i32, i32) {
    %c0_i32 = arith.constant 0 : i32
    %c0_i32_0 = arith.constant 0 : i32
    return %arg0, %c0_i32 : i32, i32
  }
  func.func @transform_10(%arg0: i32) -> (i32, i32) {
    %c0_i32 = arith.constant 0 : i32
    %c0_i32_0 = arith.constant 0 : i32
    return %arg0, %c0_i32 : i32, i32
  }
}

</mosaic_0001>

<llo_original>
// kernel: tpu_custom_call.1
$region0: #{tpu_custom_call.1}
  #allocation0 [shape = 'u32[]', space=smem, size = 0x4, offset = 0x4, fixed_abs, tag = 'smem constant byte address 0x4 - core index']
  #allocation1 [shape = 'u32[144,128]{1,0:T(1,128)}', space=vmem, size = 0x12000, scoped, tag = 'internal scratch']
  %s0 = inlined_call_operand.vmem [shape: bf16[16,784], index: 0, kind: input, shape index: {}]
  %s1 = inlined_call_operand.vmem [shape: bf16[784,16], index: 1, kind: input, shape index: {}]
  %s2 = inlined_call_operand.vmem [shape: f32[1,16], index: 2, kind: input, shape index: {}]
  %s3 = inlined_call_operand.vmem [shape: bf16[16,1024], index: 3, kind: input, shape index: {}]
  %s4 = inlined_call_operand.vmem [shape: f32[1,1024], index: 4, kind: input, shape index: {}]
  %s5 = inlined_call_operand.hbm [shape: bf16[1024,256], index: 5, kind: input, shape index: {}]
  %s6 = inlined_call_operand.vmem [shape: f32[1,256], index: 6, kind: input, shape index: {}]
  %s7 = inlined_call_operand.vmem [shape: bf16[256,128], index: 7, kind: input, shape index: {}]
  %s8 = inlined_call_operand.vmem [shape: f32[1,128], index: 8, kind: input, shape index: {}]
  %s9 = inlined_call_operand.hbm [shape: f32[16,128], index: 9, kind: output, shape index: {0}]
  %s10 = inlined_call_operand.hbm [shape: f32[16,16], index: 10, kind: output, shape index: {1}]
  %11 = xla_tuple %s9, %s10
  %s12 = sld [smem:[#allocation0]]
  $region58: #{tpu_custom_call.1} parent=0
    _
  %s14 = ssub.s32 1, %s12
  %s15 = scalar_select 0, %s14, %s12
  $region1: #{tpu_custom_call.1} parent=0
    #allocation2 [shape = 'u8[524288]{0}', space=vmem, size = 0x80000, scoped, tag = 'input window, operand 5, single buffered']
    #allocation3 [shape = 's32[1]{0}', space=sflag, size = 0x4, scoped, tag = 'scoped memory for tpu_custom_call.1']
    #allocation4 [shape = 's32[1]{0}', space=sflag, size = 0x4, scoped, tag = 'scoped memory for tpu_custom_call.1']
    #allocation5 [shape = 'u8[8192]{0}', space=vmem, size = 0x2000, scoped, tag = 'output window, operand 0, single buffered']
    #allocation6 [shape = 'u8[8192]{0}', space=vmem, size = 0x2000, scoped, tag = 'output window, operand 1, single buffered']
    #allocation7 [shape = 's32[1]{0}', space=sflag, size = 0x4, scoped, tag = 'scoped memory for tpu_custom_call.1']
    %16 = vsyncpa [#allocation3], 0
    %17 = vsyncpa [#allocation4], 0
    %18 = vsyncpa [#allocation7], 0
    // Predicated region
    $region2: #{tpu_custom_call.1} parent=1 // pred_check
      _
    $region3: #{tpu_custom_call.1} parent=1 // pred_check_branch
      %20 = sbr.rel (0) target = $region5
    $region4: #{tpu_custom_call.1} parent=1 // pred_region
      _
    $region5: #{tpu_custom_call.1} parent=1 // pred_fallthru
      _
    // Predicated region
    $region6: #{tpu_custom_call.1} parent=1 // pred_check
      _
    $region7: #{tpu_custom_call.1} parent=1 // pred_check_branch
      %22 = sbr.rel (0) target = $region9
    $region8: #{tpu_custom_call.1} parent=1 // pred_region
      _
    $region9: #{tpu_custom_call.1} parent=1 // pred_fallthru
      _
    // Predicated region
    $region10: #{tpu_custom_call.1} parent=1 // pred_check
      _
    $region11: #{tpu_custom_call.1} parent=1 // pred_check_branch
      %24 = sbr.rel (0) target = $region13
    $region12: #{tpu_custom_call.1} parent=1 // pred_region
      _
    $region13: #{tpu_custom_call.1} parent=1 // pred_fallthru
      _
    // Predicated region
    $region14: #{tpu_custom_call.1} parent=1 // pred_check
      _
    $region15: #{tpu_custom_call.1} parent=1 // pred_check_branch
      %26 = sbr.rel (0) target = $region17
    $region16: #{tpu_custom_call.1} parent=1 // pred_region
      _
    $region17: #{tpu_custom_call.1} parent=1 // pred_fallthru
      _
    // Predicated region
    $region18: #{tpu_custom_call.1} parent=1 // pred_check
      _
    $region19: #{tpu_custom_call.1} parent=1 // pred_check_branch
      %28 = sbr.rel (0) target = $region21
    $region20: #{tpu_custom_call.1} parent=1 // pred_region
      _
    $region21: #{tpu_custom_call.1} parent=1 // pred_fallthru
      _
    // Predicated region
    $region22: #{tpu_custom_call.1} parent=1 // pred_check
      _
    $region23: #{tpu_custom_call.1} parent=1 // pred_check_branch
      %30 = sbr.rel (0) target = $region25
    $region24: #{tpu_custom_call.1} parent=1 // pred_region
      %s32 = ssub.s32 16384, 16384
      %33 = vsyncadd [#allocation3], %s32
      %s34 = sshll.u32 [#allocation2], 4
      %s35 = int_to_ptr.vmem [resolvable:$true] %s34
      %40 = dma.hbm_to_vmem [thread:$0]  %s5, 16384, %s35, [#allocation3], 128, 128, 8
    $region25: #{tpu_custom_call.1} parent=1 // pred_fallthru
      _
    // Predicated region
    $region26: #{tpu_custom_call.1} parent=1 // pred_check
      _
    $region27: #{tpu_custom_call.1} parent=1 // pred_check_branch
      %42 = sbr.rel (0) target = $region29
    $region28: #{tpu_custom_call.1} parent=1 // pred_region
      _
    $region29: #{tpu_custom_call.1} parent=1 // pred_fallthru
      _
    // Predicated region
    $region30: #{tpu_custom_call.1} parent=1 // pred_check
      _
    $region31: #{tpu_custom_call.1} parent=1 // pred_check_branch
      %44 = sbr.rel (0) target = $region33
    $region32: #{tpu_custom_call.1} parent=1 // pred_region
      _
    $region33: #{tpu_custom_call.1} parent=1 // pred_fallthru
      _
    // Predicated region
    $region34: #{tpu_custom_call.1} parent=1 // pred_check
      _
    $region35: #{tpu_custom_call.1} parent=1 // pred_check_branch
      %46 = sbr.rel (0) target = $region37
    $region36: #{tpu_custom_call.1} parent=1 // pred_region
      _
    $region37: #{tpu_custom_call.1} parent=1 // pred_fallthru
      _
    // Predicated region
    $region38: #{tpu_custom_call.1} parent=1 // pred_check
      _
    $region39: #{tpu_custom_call.1} parent=1 // pred_check_branch
      %48 = sbr.rel (0) target = $region41
    $region40: #{tpu_custom_call.1} parent=1 // pred_region
      %49 = dma.done [#allocation3], 16384
    $region41: #{tpu_custom_call.1} parent=1 // pred_fallthru
      _
    %v51 = vld [vmem:[%s0] sm:$0xff]
    %v52 = vld [vmem:[%s0 + $0x8] sm:$0xff]
    %v53 = vld [vmem:[%s0 + $0x10] sm:$0xff]
    %v54 = vld [vmem:[%s0 + $0x18] sm:$0xf]
    %v55 = vld [vmem:[%s0 + $0x1c] sm:$0xff]
    %v56 = vld [vmem:[%s0 + $0x24] sm:$0xff]
    %v57 = vld [vmem:[%s0 + $0x2c] sm:$0xff]
    %v58 = vld [vmem:[%s0 + $0x34] sm:$0xf]
    %v59 = vld [vmem:[%s1] sm:$0xf]
    %v60 = vld [vmem:[%s1 + $0x4] sm:$0xf]
    %v61 = vld [vmem:[%s1 + $0x8] sm:$0xf]
    %v62 = vld [vmem:[%s1 + $0xc] sm:$0xf]
    %v63 = vld [vmem:[%s1 + $0x10] sm:$0xf]
    %v64 = vld [vmem:[%s1 + $0x14] sm:$0xf]
    %v65 = vld [vmem:[%s1 + $0x18] sm:$0xf]
    %v66 = vld [vmem:[%s1 + $0x1c] sm:$0xf]
    %v67 = vld [vmem:[%s1 + $0x20] sm:$0xf]
    %v68 = vld [vmem:[%s1 + $0x24] sm:$0xf]
    %v69 = vld [vmem:[%s1 + $0x28] sm:$0xf]
    %v70 = vld [vmem:[%s1 + $0x2c] sm:$0xf]
    %v71 = vld [vmem:[%s1 + $0x30] sm:$0xf]
    %v72 = vld [vmem:[%s1 + $0x34] sm:$0xf]
    %v73 = vld [vmem:[%s1 + $0x38] sm:$0xf]
    %v74 = vld [vmem:[%s1 + $0x3c] sm:$0xf]
    %v75 = vld [vmem:[%s1 + $0x40] sm:$0xf]
    %v76 = vld [vmem:[%s1 + $0x44] sm:$0xf]
    %v77 = vld [vmem:[%s1 + $0x48] sm:$0xf]
    %v78 = vld [vmem:[%s1 + $0x4c] sm:$0xf]
    %v79 = vld [vmem:[%s1 + $0x50] sm:$0xf]
    %v80 = vld [vmem:[%s1 + $0x54] sm:$0xf]
    %v81 = vld [vmem:[%s1 + $0x58] sm:$0xf]
    %v82 = vld [vmem:[%s1 + $0x5c] sm:$0xf]
    %v83 = vld [vmem:[%s1 + $0x60] sm:$0xf]
    %v84 = vld [vmem:[%s1 + $0x64] sm:$0xf]
    %v85 = vld [vmem:[%s1 + $0x68] sm:$0xf]
    %v86 = vld [vmem:[%s1 + $0x6c] sm:$0xf]
    %v87 = vld [vmem:[%s1 + $0x70] sm:$0xf]
    %v88 = vld [vmem:[%s1 + $0x74] sm:$0xf]
    %v89 = vld [vmem:[%s1 + $0x78] sm:$0xf]
    %v90 = vld [vmem:[%s1 + $0x7c] sm:$0xf]
    %v91 = vld [vmem:[%s1 + $0x80] sm:$0xf]
    %v92 = vld [vmem:[%s1 + $0x84] sm:$0xf]
    %v93 = vld [vmem:[%s1 + $0x88] sm:$0xf]
    %v94 = vld [vmem:[%s1 + $0x8c] sm:$0xf]
    %v95 = vld [vmem:[%s1 + $0x90] sm:$0xf]
    %v96 = vld [vmem:[%s1 + $0x94] sm:$0xf]
    %v97 = vld [vmem:[%s1 + $0x98] sm:$0xf]
    %v98 = vld [vmem:[%s1 + $0x9c] sm:$0xf]
    %v99 = vld [vmem:[%s1 + $0xa0] sm:$0xf]
    %v100 = vld [vmem:[%s1 + $0xa4] sm:$0xf]
    %v101 = vld [vmem:[%s1 + $0xa8] sm:$0xf]
    %v102 = vld [vmem:[%s1 + $0xac] sm:$0xf]
    %v103 = vld [vmem:[%s1 + $0xb0] sm:$0xf]
    %v104 = vld [vmem:[%s1 + $0xb4] sm:$0xf]
    %v105 = vld [vmem:[%s1 + $0xb8] sm:$0xf]
    %v106 = vld [vmem:[%s1 + $0xbc] sm:$0xf]
    %v107 = vld [vmem:[%s1 + $0xc0] sm:$0xf]
    %v108 = vld [vmem:[%s1 + $0xc4] sm:$0xf]
    %v109 = vld [vmem:[%s1 + $0xc8] sm:$0xf]
    %v110 = vld [vmem:[%s1 + $0xcc] sm:$0xf]
    %v111 = vld [vmem:[%s1 + $0xd0] sm:$0xf]
    %v112 = vld [vmem:[%s1 + $0xd4] sm:$0xf]
    %v113 = vld [vmem:[%s1 + $0xd8] sm:$0xf]
    %v114 = vld [vmem:[%s1 + $0xdc] sm:$0xf]
    %v115 = vld [vmem:[%s1 + $0xe0] sm:$0xf]
    %v116 = vld [vmem:[%s1 + $0xe4] sm:$0xf]
    %v117 = vld [vmem:[%s1 + $0xe8] sm:$0xf]
    %v118 = vld [vmem:[%s1 + $0xec] sm:$0xf]
    %v119 = vld [vmem:[%s1 + $0xf0] sm:$0xf]
    %v120 = vld [vmem:[%s1 + $0xf4] sm:$0xf]
    %v121 = vld [vmem:[%s1 + $0xf8] sm:$0xf]
    %v122 = vld [vmem:[%s1 + $0xfc] sm:$0xf]
    %v123 = vld [vmem:[%s1 + $0x100] sm:$0xf]
    %v124 = vld [vmem:[%s1 + $0x104] sm:$0xf]
    %v125 = vld [vmem:[%s1 + $0x108] sm:$0xf]
    %v126 = vld [vmem:[%s1 + $0x10c] sm:$0xf]
    %v127 = vld [vmem:[%s1 + $0x110] sm:$0xf]
    %v128 = vld [vmem:[%s1 + $0x114] sm:$0xf]
    %v129 = vld [vmem:[%s1 + $0x118] sm:$0xf]
    %v130 = vld [vmem:[%s1 + $0x11c] sm:$0xf]
    %v131 = vld [vmem:[%s1 + $0x120] sm:$0xf]
    %v132 = vld [vmem:[%s1 + $0x124] sm:$0xf]
    %v133 = vld [vmem:[%s1 + $0x128] sm:$0xf]
    %v134 = vld [vmem:[%s1 + $0x12c] sm:$0xf]
    %v135 = vld [vmem:[%s1 + $0x130] sm:$0xf]
    %v136 = vld [vmem:[%s1 + $0x134] sm:$0xf]
    %v137 = vld [vmem:[%s1 + $0x138] sm:$0xf]
    %v138 = vld [vmem:[%s1 + $0x13c] sm:$0xf]
    %v139 = vld [vmem:[%s1 + $0x140] sm:$0xf]
    %v140 = vld [vmem:[%s1 + $0x144] sm:$0xf]
    %v141 = vld [vmem:[%s1 + $0x148] sm:$0xf]
    %v142 = vld [vmem:[%s1 + $0x14c] sm:$0xf]
    %v143 = vld [vmem:[%s1 + $0x150] sm:$0xf]
    %v144 = vld [vmem:[%s1 + $0x154] sm:$0xf]
    %v145 = vld [vmem:[%s1 + $0x158] sm:$0xf]
    %v146 = vld [vmem:[%s1 + $0x15c] sm:$0xf]
    %v147 = vld [vmem:[%s1 + $0x160] sm:$0xf]
    %v148 = vld [vmem:[%s1 + $0x164] sm:$0xf]
    %v149 = vld [vmem:[%s1 + $0x168] sm:$0xf]
    %v150 = vld [vmem:[%s1 + $0x16c] sm:$0xf]
    %v151 = vld [vmem:[%s1 + $0x170] sm:$0xf]
    %v152 = vld [vmem:[%s1 + $0x174] sm:$0xf]
    %v153 = vld [vmem:[%s1 + $0x178] sm:$0xf]
    %v154 = vld [vmem:[%s1 + $0x17c] sm:$0xf]
    %v155 = vld [vmem:[%s1 + $0x180] sm:$0xf]
    %v156 = vld [vmem:[%s1 + $0x184] sm:$0xf]
    %v157 = vld [vmem:[%s2] sm:$0x1]
    %v159 = vlaneseq
    %v160 = vshrl.u32 %v159, 7
    %v161 = vsub.s32 0, %v160
    %v162 = vrot.slane %v157, %v161
    %v172 = vunpack.c.l.b16 %v51
    %v173 = vunpack.c.h.b16 %v51
    %v174 = vunpack.c.l.b16 %v52
    %v175 = vunpack.c.h.b16 %v52
    %v176 = vunpack.c.l.b16 %v53
    %v177 = vunpack.c.h.b16 %v53
    %v178 = vunpack.c.l.b16 %v54
    %v179 = vunpack.c.l.b16 %v55
    %v180 = vunpack.c.h.b16 %v55
    %v181 = vunpack.c.l.b16 %v56
    %v182 = vunpack.c.h.b16 %v56
    %v183 = vunpack.c.l.b16 %v57
    %v184 = vunpack.c.h.b16 %v57
    %v185 = vunpack.c.l.b16 %v58
    %v186 = vpack.c.b16 %v179, %v172
    %v187 = vpack.c.b16 %v180, %v173
    %v188 = vpack.c.b16 %v181, %v174
    %v189 = vpack.c.b16 %v182, %v175
    %v190 = vpack.c.b16 %v183, %v176
    %v191 = vpack.c.b16 %v184, %v177
    %v192 = vpack.c.b16 %v185, %v178
    %v297 = vunpack.c.l.b16 %v59
    %v298 = vunpack.c.l.b16 %v60
    %v299 = vunpack.c.l.b16 %v61
    %v300 = vunpack.c.l.b16 %v62
    %v301 = vunpack.c.l.b16 %v63
    %v302 = vunpack.c.l.b16 %v64
    %v303 = vunpack.c.l.b16 %v65
    %v304 = vunpack.c.l.b16 %v66
    %v305 = vunpack.c.l.b16 %v67
    %v306 = vunpack.c.l.b16 %v68
    %v307 = vunpack.c.l.b16 %v69
    %v308 = vunpack.c.l.b16 %v70
    %v309 = vunpack.c.l.b16 %v71
    %v310 = vunpack.c.l.b16 %v72
    %v311 = vunpack.c.l.b16 %v73
    %v312 = vunpack.c.l.b16 %v74
    %v313 = vunpack.c.l.b16 %v75
    %v314 = vunpack.c.l.b16 %v76
    %v315 = vunpack.c.l.b16 %v77
    %v316 = vunpack.c.l.b16 %v78
    %v317 = vunpack.c.l.b16 %v79
    %v318 = vunpack.c.l.b16 %v80
    %v319 = vunpack.c.l.b16 %v81
    %v320 = vunpack.c.l.b16 %v82
    %v321 = vunpack.c.l.b16 %v83
    %v322 = vunpack.c.l.b16 %v84
    %v323 = vunpack.c.l.b16 %v85
    %v324 = vunpack.c.l.b16 %v86
    %v325 = vunpack.c.l.b16 %v87
    %v326 = vunpack.c.l.b16 %v88
    %v327 = vunpack.c.l.b16 %v89
    %v328 = vunpack.c.l.b16 %v90
    %v329 = vunpack.c.l.b16 %v91
    %v330 = vunpack.c.l.b16 %v92
    %v331 = vunpack.c.l.b16 %v93
    %v332 = vunpack.c.l.b16 %v94
    %v333 = vunpack.c.l.b16 %v95
    %v334 = vunpack.c.l.b16 %v96
    %v335 = vunpack.c.l.b16 %v97
    %v336 = vunpack.c.l.b16 %v98
    %v337 = vunpack.c.l.b16 %v99
    %v338 = vunpack.c.l.b16 %v100
    %v339 = vunpack.c.l.b16 %v101
    %v340 = vunpack.c.l.b16 %v102
    %v341 = vunpack.c.l.b16 %v103
    %v342 = vunpack.c.l.b16 %v104
    %v343 = vunpack.c.l.b16 %v105
    %v344 = vunpack.c.l.b16 %v106
    %v345 = vunpack.c.l.b16 %v107
    %v346 = vunpack.c.l.b16 %v108
    %v347 = vunpack.c.l.b16 %v109
    %v348 = vunpack.c.l.b16 %v110
    %v349 = vunpack.c.l.b16 %v111
    %v350 = vunpack.c.l.b16 %v112
    %v351 = vunpack.c.l.b16 %v113
    %v352 = vunpack.c.l.b16 %v114
    %v353 = vunpack.c.l.b16 %v115
    %v354 = vunpack.c.l.b16 %v116
    %v355 = vunpack.c.l.b16 %v117
    %v356 = vunpack.c.l.b16 %v118
    %v357 = vunpack.c.l.b16 %v119
    %v358 = vunpack.c.l.b16 %v120
    %v359 = vunpack.c.l.b16 %v121
    %v360 = vunpack.c.l.b16 %v122
    %v361 = vunpack.c.l.b16 %v123
    %v362 = vunpack.c.l.b16 %v124
    %v363 = vunpack.c.l.b16 %v125
    %v364 = vunpack.c.l.b16 %v126
    %v365 = vunpack.c.l.b16 %v127
    %v366 = vunpack.c.l.b16 %v128
    %v367 = vunpack.c.l.b16 %v129
    %v368 = vunpack.c.l.b16 %v130
    %v369 = vunpack.c.l.b16 %v131
    %v370 = vunpack.c.l.b16 %v132
    %v371 = vunpack.c.l.b16 %v133
    %v372 = vunpack.c.l.b16 %v134
    %v373 = vunpack.c.l.b16 %v135
    %v374 = vunpack.c.l.b16 %v136
    %v375 = vunpack.c.l.b16 %v137
    %v376 = vunpack.c.l.b16 %v138
    %v377 = vunpack.c.l.b16 %v139
    %v378 = vunpack.c.l.b16 %v140
    %v379 = vunpack.c.l.b16 %v141
    %v380 = vunpack.c.l.b16 %v142
    %v381 = vunpack.c.l.b16 %v143
    %v382 = vunpack.c.l.b16 %v144
    %v383 = vunpack.c.l.b16 %v145
    %v384 = vunpack.c.l.b16 %v146
    %v385 = vunpack.c.l.b16 %v147
    %v386 = vunpack.c.l.b16 %v148
    %v387 = vunpack.c.l.b16 %v149
    %v388 = vunpack.c.l.b16 %v150
    %v389 = vunpack.c.l.b16 %v151
    %v390 = vunpack.c.l.b16 %v152
    %v391 = vunpack.c.l.b16 %v153
    %v392 = vunpack.c.l.b16 %v154
    %v393 = vunpack.c.l.b16 %v155
    %v394 = vunpack.c.l.b16 %v156
    %v395 = vpack.c.b16 %v298, %v297
    %v396 = vpack.c.b16 %v300, %v299
    %v397 = vpack.c.b16 %v302, %v301
    %v398 = vpack.c.b16 %v304, %v303
    %v399 = vpack.c.b16 %v306, %v305
    %v400 = vpack.c.b16 %v308, %v307
    %v401 = vpack.c.b16 %v310, %v309
    %v402 = vpack.c.b16 %v312, %v311
    %v403 = vpack.c.b16 %v314, %v313
    %v404 = vpack.c.b16 %v316, %v315
    %v405 = vpack.c.b16 %v318, %v317
    %v406 = vpack.c.b16 %v320, %v319
    %v407 = vpack.c.b16 %v322, %v321
    %v408 = vpack.c.b16 %v324, %v323
    %v409 = vpack.c.b16 %v326, %v325
    %v410 = vpack.c.b16 %v328, %v327
    %v411 = vpack.c.b16 %v330, %v329
    %v412 = vpack.c.b16 %v332, %v331
    %v413 = vpack.c.b16 %v334, %v333
    %v414 = vpack.c.b16 %v336, %v335
    %v415 = vpack.c.b16 %v338, %v337
    %v416 = vpack.c.b16 %v340, %v339
    %v417 = vpack.c.b16 %v342, %v341
    %v418 = vpack.c.b16 %v344, %v343
    %v419 = vpack.c.b16 %v346, %v345
    %v420 = vpack.c.b16 %v348, %v347
    %v421 = vpack.c.b16 %v350, %v349
    %v422 = vpack.c.b16 %v352, %v351
    %v423 = vpack.c.b16 %v354, %v353
    %v424 = vpack.c.b16 %v356, %v355
    %v425 = vpack.c.b16 %v358, %v357
    %v426 = vpack.c.b16 %v360, %v359
    %v427 = vpack.c.b16 %v362, %v361
    %v428 = vpack.c.b16 %v364, %v363
    %v429 = vpack.c.b16 %v366, %v365
    %v430 = vpack.c.b16 %v368, %v367
    %v431 = vpack.c.b16 %v370, %v369
    %v432 = vpack.c.b16 %v372, %v371
    %v433 = vpack.c.b16 %v374, %v373
    %v434 = vpack.c.b16 %v376, %v375
    %v435 = vpack.c.b16 %v378, %v377
    %v436 = vpack.c.b16 %v380, %v379
    %v437 = vpack.c.b16 %v382, %v381
    %v438 = vpack.c.b16 %v384, %v383
    %v439 = vpack.c.b16 %v386, %v385
    %v440 = vpack.c.b16 %v388, %v387
    %v441 = vpack.c.b16 %v390, %v389
    %v442 = vpack.c.b16 %v392, %v391
    %v443 = vpack.c.b16 %v394, %v393
    %vm493 = vcmask 130048
    %v495 = vsel %vm493, %v192, 0
    %497 = vmatprep.subr.bf16.mxu0 0
    %498 = vmatpush1.bf16.msra.mxu0 %v395
    %499 = vmatprep.subr.bf16.mxu0 0
    %500 = vmatpush1.bf16.msra.mxu0 %v396
    %501 = vmatprep.subr.bf16.mxu0 0
    %502 = vmatpush1.bf16.msra.mxu0 %v397
    %503 = vmatprep.subr.bf16.mxu0 0
    %504 = vmatpush1.bf16.msra.mxu0 %v398
    %505 = vmatprep.subr.bf16.mxu0 0
    %506 = vmatpush1.bf16.msra.mxu0 %v399
    %507 = vmatprep.subr.bf16.mxu0 0
    %508 = vmatpush1.bf16.msra.mxu0 %v400
    %509 = vmatprep.subr.bf16.mxu0 0
    %510 = vmatpush1.bf16.msra.mxu0 %v401
    %511 = vmatprep.subr.bf16.mxu0 0
    %512 = vmatpush1.bf16.msra.mxu0 %v402
    %513 = vmatprep.subr.bf16.mxu0 0
    %514 = vmatpush1.bf16.msra.mxu0 %v403
    %515 = vmatprep.subr.bf16.mxu0 0
    %516 = vmatpush1.bf16.msra.mxu0 %v404
    %517 = vmatprep.subr.bf16.mxu0 0
    %518 = vmatpush1.bf16.msra.mxu0 %v405
    %519 = vmatprep.subr.bf16.mxu0 0
    %520 = vmatpush1.bf16.msra.mxu0 %v406
    %521 = vmatprep.subr.bf16.mxu0 0
    %522 = vmatpush1.bf16.msra.mxu0 %v407
    %523 = vmatprep.subr.bf16.mxu0 0
    %524 = vmatpush1.bf16.msra.mxu0 %v408
    %525 = vmatprep.subr.bf16.mxu0 0
    %526 = vmatpush1.bf16.msra.mxu0 %v409
    %527 = vmatprep.subr.bf16.mxu0 0
    %528 = vmatpush1.bf16.msra.mxu0 %v410
    %529 = vmatprep.mubr.bf16.mxu0 %v187
    %530 = vmatmul.mubr.bf16.gmra.mrb[0].mxu0 %v186
    %v531 = vpop.f32.mrb[0].mxu0
    %v532 = vadd.f32 %v162, %v531
    %v533 = vpop.f32.mrb[0].mxu0
    %v534 = vpop.f32.mrb[0].mxu0
    %v535 = vadd.f32 %v162, %v534
    %v536 = vpop.f32.mrb[0].mxu0
    %537 = vdwg.mxu0
    %538 = vmatprep.subr.bf16.mxu0 0
    %539 = vmatpush1.bf16.msra.mxu0 %v411
    %540 = vmatprep.subr.bf16.mxu0 0
    %541 = vmatpush1.bf16.msra.mxu0 %v412
    %542 = vmatprep.subr.bf16.mxu0 0
    %543 = vmatpush1.bf16.msra.mxu0 %v413
    %544 = vmatprep.subr.bf16.mxu0 0
    %545 = vmatpush1.bf16.msra.mxu0 %v414
    %546 = vmatprep.subr.bf16.mxu0 0
    %547 = vmatpush1.bf16.msra.mxu0 %v415
    %548 = vmatprep.subr.bf16.mxu0 0
    %549 = vmatpush1.bf16.msra.mxu0 %v416
    %550 = vmatprep.subr.bf16.mxu0 0
    %551 = vmatpush1.bf16.msra.mxu0 %v417
    %552 = vmatprep.subr.bf16.mxu0 0
    %553 = vmatpush1.bf16.msra.mxu0 %v418
    %554 = vmatprep.subr.bf16.mxu0 0
    %555 = vmatpush1.bf16.msra.mxu0 %v419
    %556 = vmatprep.subr.bf16.mxu0 0
    %557 = vmatpush1.bf16.msra.mxu0 %v420
    %558 = vmatprep.subr.bf16.mxu0 0
    %559 = vmatpush1.bf16.msra.mxu0 %v421
    %560 = vmatprep.subr.bf16.mxu0 0
    %561 = vmatpush1.bf16.msra.mxu0 %v422
    %562 = vmatprep.subr.bf16.mxu0 0
    %563 = vmatpush1.bf16.msra.mxu0 %v423
    %564 = vmatprep.subr.bf16.mxu0 0
    %565 = vmatpush1.bf16.msra.mxu0 %v424
    %566 = vmatprep.subr.bf16.mxu0 0
    %567 = vmatpush1.bf16.msra.mxu0 %v425
    %568 = vmatprep.subr.bf16.mxu0 0
    %569 = vmatpush1.bf16.msra.mxu0 %v426
    %570 = vmatprep.mubr.bf16.mxu0 %v189
    %571 = vmatmul.mubr.bf16.gmra.mrb[0].mxu0 %v188
    %v572 = vpop.f32.mrb[0].mxu0
    %v573 = vadd.f32 %v532, %v572
    %v574 = vpop.f32.mrb[0].mxu0
    %v575 = vpop.f32.mrb[0].mxu0
    %v576 = vadd.f32 %v535, %v575
    %v577 = vpop.f32.mrb[0].mxu0
    %578 = vdwg.mxu0
    %579 = vmatprep.subr.bf16.mxu0 0
    %580 = vmatpush1.bf16.msra.mxu0 %v427
    %581 = vmatprep.subr.bf16.mxu0 0
    %582 = vmatpush1.bf16.msra.mxu0 %v428
    %583 = vmatprep.subr.bf16.mxu0 0
    %584 = vmatpush1.bf16.msra.mxu0 %v429
    %585 = vmatprep.subr.bf16.mxu0 0
    %586 = vmatpush1.bf16.msra.mxu0 %v430
    %587 = vmatprep.subr.bf16.mxu0 0
    %588 = vmatpush1.bf16.msra.mxu0 %v431
    %589 = vmatprep.subr.bf16.mxu0 0
    %590 = vmatpush1.bf16.msra.mxu0 %v432
    %591 = vmatprep.subr.bf16.mxu0 0
    %592 = vmatpush1.bf16.msra.mxu0 %v433
    %593 = vmatprep.subr.bf16.mxu0 0
    %594 = vmatpush1.bf16.msra.mxu0 %v434
    %595 = vmatprep.subr.bf16.mxu0 0
    %596 = vmatpush1.bf16.msra.mxu0 %v435
    %597 = vmatprep.subr.bf16.mxu0 0
    %598 = vmatpush1.bf16.msra.mxu0 %v436
    %599 = vmatprep.subr.bf16.mxu0 0
    %600 = vmatpush1.bf16.msra.mxu0 %v437
    %601 = vmatprep.subr.bf16.mxu0 0
    %602 = vmatpush1.bf16.msra.mxu0 %v438
    %603 = vmatprep.subr.bf16.mxu0 0
    %604 = vmatpush1.bf16.msra.mxu0 %v439
    %605 = vmatprep.subr.bf16.mxu0 0
    %606 = vmatpush1.bf16.msra.mxu0 %v440
    %607 = vmatprep.subr.bf16.mxu0 0
    %608 = vmatpush1.bf16.msra.mxu0 %v441
    %609 = vmatprep.subr.bf16.mxu0 0
    %610 = vmatpush1.bf16.msra.mxu0 %v442
    %611 = vmatprep.mubr.bf16.mxu0 %v191
    %612 = vmatmul.mubr.bf16.gmra.mrb[0].mxu0 %v190
    %v613 = vpop.f32.mrb[0].mxu0
    %v614 = vadd.f32 %v573, %v613
    %v615 = vpop.f32.mrb[0].mxu0
    %v616 = vpop.f32.mrb[0].mxu0
    %v617 = vadd.f32 %v576, %v616
    %v618 = vpop.f32.mrb[0].mxu0
    %619 = vdwg.mxu0
    %620 = vmatprep.subr.bf16.mxu0 0
    %621 = vmatpush1.bf16.msra.mxu0 %v443
    %622 = vmatprep.subr.bf16.mxu0 0
    %623 = vmatpush1.bf16.msra.mxu0 0
    %624 = vmatprep.subr.bf16.mxu0 0
    %625 = vmatpush1.bf16.msra.mxu0 0
    %626 = vmatprep.subr.bf16.mxu0 0
    %627 = vmatpush1.bf16.msra.mxu0 0
    %628 = vmatprep.subr.bf16.mxu0 0
    %629 = vmatpush1.bf16.msra.mxu0 0
    %630 = vmatprep.subr.bf16.mxu0 0
    %631 = vmatpush1.bf16.msra.mxu0 0
    %632 = vmatprep.subr.bf16.mxu0 0
    %633 = vmatpush1.bf16.msra.mxu0 0
    %634 = vmatprep.subr.bf16.mxu0 0
    %635 = vmatpush1.bf16.msra.mxu0 0
    %636 = vmatprep.subr.bf16.mxu0 0
    %637 = vmatpush1.bf16.msra.mxu0 0
    %638 = vmatprep.subr.bf16.mxu0 0
    %639 = vmatpush1.bf16.msra.mxu0 0
    %640 = vmatprep.subr.bf16.mxu0 0
    %641 = vmatpush1.bf16.msra.mxu0 0
    %642 = vmatprep.subr.bf16.mxu0 0
    %643 = vmatpush1.bf16.msra.mxu0 0
    %644 = vmatprep.subr.bf16.mxu0 0
    %645 = vmatpush1.bf16.msra.mxu0 0
    %646 = vmatprep.subr.bf16.mxu0 0
    %647 = vmatpush1.bf16.msra.mxu0 0
    %648 = vmatprep.subr.bf16.mxu0 0
    %649 = vmatpush1.bf16.msra.mxu0 0
    %650 = vmatprep.subr.bf16.mxu0 0
    %651 = vmatpush1.bf16.msra.mxu0 0
    %652 = vmatprep.mubr.bf16.mxu0 0
    %653 = vmatmul.mubr.bf16.gmra.mrb[0].mxu0 %v495
    %v654 = vpop.f32.mrb[0].mxu0
    %v655 = vadd.f32 %v614, %v654
    %v656 = vpop.f32.mrb[0].mxu0
    %v657 = vpop.f32.mrb[0].mxu0
    %v658 = vadd.f32 %v617, %v657
    %v659 = vpop.f32.mrb[0].mxu0
    %660 = vdwg.mxu0
    %vm661 = vcmask 31744
    %v662 = vsel %vm661, %v655, -inf
    %663 = vmax.xlane.f32.xlu0 %v662
    %v664 = vpop.xlane.xlu0 %663
    %v665 = vsel %vm661, %v658, -inf
    %666 = vmax.xlane.f32.xlu0 %v665
    %v667 = vpop.xlane.xlu0 %666
    %v668 = vsub.f32 %v655, %v664
    %v669 = vsub.f32 %v658, %v667
    %v670 = vmul.f32 %v668, 1.442695
    %v671 = vpow.pop %v670
    %v672 = vmul.f32 %v669, 1.442695
    %v673 = vpow.pop %v672
    %v674 = vsel %vm661, %v671, 0.0
    %675 = vadd.xlane.f32.xlu0 %v674
    %v676 = vpop.xlane.xlu0 %675
    %v677 = vsel %vm661, %v673, 0.0
    %678 = vadd.xlane.f32.xlu0 %v677
    %v679 = vpop.xlane.xlu0 %678
    %v680 = vrcp.pop %v676
    %v681 = vmul.f32 %v671, %v680
    %v682 = vrcp.pop %v679
    %v683 = vmul.f32 %v673, %v682
    %v684 = vlaneseq
    %v685 = vand.u32 %v684, 127
    %vm686 = vcmp.ge.f32.partialorder %v655, %v664
    %vm687 = vcmp.ge.f32.partialorder %v658, %v667
    %v688 = vsel %vm686, %v685, 4
    %v689 = vsel %vm687, %v685, 4
    %v690 = vsel %vm661, %v688, 2147483647
    %v691 = vand.u32 %v690, 65535
    %v692 = vshra.s32 %v690, 16
    %v693 = vcvt.s32.f32 %v691
    %v694 = vcvt.s32.f32 %v692
    %695 = vmin.xlane.f32.xlu0 %v694
    %v696 = vpop.xlane.xlu0 %695
    %vm697 = vcmp.eq.f32.partialorder %v694, %v696
    %v698 = vsel %vm697, %v693, inf
    %699 = vmin.xlane.f32.xlu0 %v698
    %v700 = vpop.xlane.xlu0 %699
    %v701 = vcvt.f32.s32 %v700
    %v702 = vcvt.f32.s32 %v696
    %v703 = vshll.u32 %v702, 16
    %v704 = vadd.s32 %v703, %v701
    %v705 = vsel %vm661, %v689, 2147483647
    %v706 = vand.u32 %v705, 65535
    %v707 = vshra.s32 %v705, 16
    %v708 = vcvt.s32.f32 %v706
    %v709 = vcvt.s32.f32 %v707
    %710 = vmin.xlane.f32.xlu0 %v709
    %v711 = vpop.xlane.xlu0 %710
    %vm712 = vcmp.eq.f32.partialorder %v709, %v711
    %v713 = vsel %vm712, %v708, inf
    %714 = vmin.xlane.f32.xlu0 %v713
    %v715 = vpop.xlane.xlu0 %714
    %v716 = vcvt.f32.s32 %v715
    %v717 = vcvt.f32.s32 %v711
    %v718 = vshll.u32 %v717, 16
    %v719 = vadd.s32 %v718, %v716
    %vm720 = vcmp.eq.s32.totalorder %v685, %v704
    %vm721 = vcmp.eq.s32.totalorder %v685, %v719
    %v722 = vsel %vm720, 1, 0
    %v723 = vsel %vm721, 1, 0
    %v724 = vcvt.s32.f32 %v722
    %v725 = vcvt.s32.f32 %v723
    %vm726 = vcmask 64544
    %v727 = vsel %vm726, %v655, -inf
    %728 = vmax.xlane.f32.xlu0 %v727
    %v729 = vpop.xlane.xlu0 %728
    %v730 = vsel %vm726, %v658, -inf
    %731 = vmax.xlane.f32.xlu0 %v730
    %v732 = vpop.xlane.xlu0 %731
    %v733 = vsub.f32 %v655, %v729
    %v734 = vsub.f32 %v658, %v732
    %v735 = vmul.f32 %v733, 1.442695
    %v736 = vpow.pop %v735
    %v737 = vmul.f32 %v734, 1.442695
    %v738 = vpow.pop %v737
    %741 = vrot.lane.b32.xlu0 %v736, 124
    %v742 = vpop.permute.xlu0 %741
    %743 = vrot.lane.b32.xlu0 %v738, 124
    %v744 = vpop.permute.xlu0 %743
    %v747 = vsel %vm661, %v742, 0.0
    %748 = vadd.xlane.f32.xlu0 %v747
    %v749 = vpop.xlane.xlu0 %748
    %v750 = vsel %vm661, %v744, 0.0
    %751 = vadd.xlane.f32.xlu0 %v750
    %v752 = vpop.xlane.xlu0 %751
    %v753 = vrcp.pop %v749
    %v754 = vmul.f32 %v736, %v753
    %v755 = vrcp.pop %v752
    %v756 = vmul.f32 %v738, %v755
    %vm757 = vcmp.ge.f32.partialorder %v655, %v729
    %vm758 = vcmp.ge.f32.partialorder %v658, %v732
    %759 = vrot.lane.b32.xlu0 %v685, 4
    %v760 = vpop.permute.xlu0 %759
    %v761 = vsel %vm757, %v760, 4
    %v762 = vsel %vm758, %v760, 4
    %v763 = vsel %vm726, %v761, 2147483647
    %v764 = vand.u32 %v763, 65535
    %v765 = vshra.s32 %v763, 16
    %v766 = vcvt.s32.f32 %v764
    %v767 = vcvt.s32.f32 %v765
    %768 = vmin.xlane.f32.xlu0 %v767
    %v769 = vpop.xlane.xlu0 %768
    %vm770 = vcmp.eq.f32.partialorder %v767, %v769
    %v771 = vsel %vm770, %v766, inf
    %772 = vmin.xlane.f32.xlu0 %v771
    %v773 = vpop.xlane.xlu0 %772
    %v774 = vcvt.f32.s32 %v773
    %v775 = vcvt.f32.s32 %v769
    %v776 = vshll.u32 %v775, 16
    %v777 = vadd.s32 %v776, %v774
    %v778 = vsel %vm726, %v762, 2147483647
    %v779 = vand.u32 %v778, 65535
    %v780 = vshra.s32 %v778, 16
    %v781 = vcvt.s32.f32 %v779
    %v782 = vcvt.s32.f32 %v780
    %783 = vmin.xlane.f32.xlu0 %v782
    %v784 = vpop.xlane.xlu0 %783
    %vm785 = vcmp.eq.f32.partialorder %v782, %v784
    %v786 = vsel %vm785, %v781, inf
    %787 = vmin.xlane.f32.xlu0 %v786
    %v788 = vpop.xlane.xlu0 %787
    %v789 = vcvt.f32.s32 %v788
    %v790 = vcvt.f32.s32 %v784
    %v791 = vshll.u32 %v790, 16
    %v792 = vadd.s32 %v791, %v789
    %vm793 = vcmp.eq.s32.totalorder %v685, %v777
    %vm794 = vcmp.eq.s32.totalorder %v685, %v792
    %v795 = vsel %vm793, 1, 0
    %v796 = vsel %vm794, 1, 0
    %v797 = vcvt.s32.f32 %v795
    %v798 = vcvt.s32.f32 %v796
    %vm799 = vcmask 97344
    %v800 = vsel %vm799, %v655, -inf
    %801 = vmax.xlane.f32.xlu0 %v800
    %v802 = vpop.xlane.xlu0 %801
    %v803 = vsel %vm799, %v658, -inf
    %804 = vmax.xlane.f32.xlu0 %v803
    %v805 = vpop.xlane.xlu0 %804
    %v806 = vsub.f32 %v655, %v802
    %v807 = vsub.f32 %v658, %v805
    %v808 = vmul.f32 %v806, 1.442695
    %v809 = vpow.pop %v808
    %v810 = vmul.f32 %v807, 1.442695
    %v811 = vpow.pop %v810
    %814 = vrot.lane.b32.xlu0 %v809, 120
    %v815 = vpop.permute.xlu0 %814
    %816 = vrot.lane.b32.xlu0 %v811, 120
    %v817 = vpop.permute.xlu0 %816
    %v820 = vsel %vm661, %v815, 0.0
    %821 = vadd.xlane.f32.xlu0 %v820
    %v822 = vpop.xlane.xlu0 %821
    %v823 = vsel %vm661, %v817, 0.0
    %824 = vadd.xlane.f32.xlu0 %v823
    %v825 = vpop.xlane.xlu0 %824
    %v826 = vrcp.pop %v822
    %v827 = vmul.f32 %v809, %v826
    %v828 = vrcp.pop %v825
    %v829 = vmul.f32 %v811, %v828
    %vm830 = vcmp.ge.f32.partialorder %v655, %v802
    %vm831 = vcmp.ge.f32.partialorder %v658, %v805
    %832 = vrot.lane.b32.xlu0 %v685, 8
    %v833 = vpop.permute.xlu0 %832
    %v834 = vsel %vm830, %v833, 4
    %v835 = vsel %vm831, %v833, 4
    %v836 = vsel %vm799, %v834, 2147483647
    %v837 = vand.u32 %v836, 65535
    %v838 = vshra.s32 %v836, 16
    %v839 = vcvt.s32.f32 %v837
    %v840 = vcvt.s32.f32 %v838
    %841 = vmin.xlane.f32.xlu0 %v840
    %v842 = vpop.xlane.xlu0 %841
    %vm843 = vcmp.eq.f32.partialorder %v840, %v842
    %v844 = vsel %vm843, %v839, inf
    %845 = vmin.xlane.f32.xlu0 %v844
    %v846 = vpop.xlane.xlu0 %845
    %v847 = vcvt.f32.s32 %v846
    %v848 = vcvt.f32.s32 %v842
    %v849 = vshll.u32 %v848, 16
    %v850 = vadd.s32 %v849, %v847
    %v851 = vsel %vm799, %v835, 2147483647
    %v852 = vand.u32 %v851, 65535
    %v853 = vshra.s32 %v851, 16
    %v854 = vcvt.s32.f32 %v852
    %v855 = vcvt.s32.f32 %v853
    %856 = vmin.xlane.f32.xlu0 %v855
    %v857 = vpop.xlane.xlu0 %856
    %vm858 = vcmp.eq.f32.partialorder %v855, %v857
    %v859 = vsel %vm858, %v854, inf
    %860 = vmin.xlane.f32.xlu0 %v859
    %v861 = vpop.xlane.xlu0 %860
    %v862 = vcvt.f32.s32 %v861
    %v863 = vcvt.f32.s32 %v857
    %v864 = vshll.u32 %v863, 16
    %v865 = vadd.s32 %v864, %v862
    %vm866 = vcmp.eq.s32.totalorder %v685, %v850
    %vm867 = vcmp.eq.s32.totalorder %v685, %v865
    %v868 = vsel %vm866, 1, 0
    %v869 = vsel %vm867, 1, 0
    %v870 = vcvt.s32.f32 %v868
    %v871 = vcvt.s32.f32 %v869
    %vm872 = vcmask 130144
    %v873 = vsel %vm872, %v655, -inf
    %874 = vmax.xlane.f32.xlu0 %v873
    %v875 = vpop.xlane.xlu0 %874
    %v876 = vsel %vm872, %v658, -inf
    %877 = vmax.xlane.f32.xlu0 %v876
    %v878 = vpop.xlane.xlu0 %877
    %v879 = vsub.f32 %v655, %v875
    %v880 = vsub.f32 %v658, %v878
    %v881 = vmul.f32 %v879, 1.442695
    %v882 = vpow.pop %v881
    %v883 = vmul.f32 %v880, 1.442695
    %v884 = vpow.pop %v883
    %887 = vrot.lane.b32.xlu0 %v882, 116
    %v888 = vpop.permute.xlu0 %887
    %889 = vrot.lane.b32.xlu0 %v884, 116
    %v890 = vpop.permute.xlu0 %889
    %v893 = vsel %vm661, %v888, 0.0
    %894 = vadd.xlane.f32.xlu0 %v893
    %v895 = vpop.xlane.xlu0 %894
    %v896 = vsel %vm661, %v890, 0.0
    %897 = vadd.xlane.f32.xlu0 %v896
    %v898 = vpop.xlane.xlu0 %897
    %v899 = vrcp.pop %v895
    %v900 = vmul.f32 %v882, %v899
    %v901 = vrcp.pop %v898
    %v902 = vmul.f32 %v884, %v901
    %vm903 = vcmp.ge.f32.partialorder %v655, %v875
    %vm904 = vcmp.ge.f32.partialorder %v658, %v878
    %905 = vrot.lane.b32.xlu0 %v685, 12
    %v906 = vpop.permute.xlu0 %905
    %v907 = vsel %vm903, %v906, 4
    %v908 = vsel %vm904, %v906, 4
    %v909 = vsel %vm872, %v907, 2147483647
    %v910 = vand.u32 %v909, 65535
    %v911 = vshra.s32 %v909, 16
    %v912 = vcvt.s32.f32 %v910
    %v913 = vcvt.s32.f32 %v911
    %914 = vmin.xlane.f32.xlu0 %v913
    %v915 = vpop.xlane.xlu0 %914
    %vm916 = vcmp.eq.f32.partialorder %v913, %v915
    %v917 = vsel %vm916, %v912, inf
    %918 = vmin.xlane.f32.xlu0 %v917
    %v919 = vpop.xlane.xlu0 %918
    %v920 = vcvt.f32.s32 %v919
    %v921 = vcvt.f32.s32 %v915
    %v922 = vshll.u32 %v921, 16
    %v923 = vadd.s32 %v922, %v920
    %v924 = vsel %vm872, %v908, 2147483647
    %v925 = vand.u32 %v924, 65535
    %v926 = vshra.s32 %v924, 16
    %v927 = vcvt.s32.f32 %v925
    %v928 = vcvt.s32.f32 %v926
    %929 = vmin.xlane.f32.xlu0 %v928
    %v930 = vpop.xlane.xlu0 %929
    %vm931 = vcmp.eq.f32.partialorder %v928, %v930
    %v932 = vsel %vm931, %v927, inf
    %933 = vmin.xlane.f32.xlu0 %v932
    %v934 = vpop.xlane.xlu0 %933
    %v935 = vcvt.f32.s32 %v934
    %v936 = vcvt.f32.s32 %v930
    %v937 = vshll.u32 %v936, 16
    %v938 = vadd.s32 %v937, %v935
    %vm939 = vcmp.eq.s32.totalorder %v685, %v923
    %vm940 = vcmp.eq.s32.totalorder %v685, %v938
    %v941 = vsel %vm939, 1, 0
    %v942 = vsel %vm940, 1, 0
    %v943 = vcvt.s32.f32 %v941
    %v944 = vcvt.s32.f32 %v942
    %v945 = vsel %vm661, %v681, %v754
    %v946 = vsel %vm661, %v683, %v756
    %vm947 = vcmask 64512
    %v948 = vsel %vm947, %v945, %v827
    %v949 = vsel %vm947, %v946, %v829
    %vm950 = vcmask 97280
    %v951 = vsel %vm950, %v948, %v900
    %v952 = vsel %vm950, %v949, %v902
    %953 = vst.msk [vmem:[#allocation6] sm:$0xff] %vm493, %v951
    %954 = vst.msk [vmem:[#allocation6 + $0x8] sm:$0xff] %vm493, %v952
    %957 = vrot.lane.b32.xlu0 %v797, 4
    %v958 = vpop.permute.xlu0 %957
    %959 = vrot.lane.b32.xlu0 %v798, 4
    %v960 = vpop.permute.xlu0 %959
    %965 = vrot.lane.b32.xlu0 %v870, 8
    %v966 = vpop.permute.xlu0 %965
    %967 = vrot.lane.b32.xlu0 %v871, 8
    %v968 = vpop.permute.xlu0 %967
    %973 = vrot.lane.b32.xlu0 %v943, 12
    %v974 = vpop.permute.xlu0 %973
    %975 = vrot.lane.b32.xlu0 %v944, 12
    %v976 = vpop.permute.xlu0 %975
    %v979 = vsel %vm661, %v724, %v958
    %v980 = vsel %vm661, %v725, %v960
    %v981 = vsel %vm947, %v979, %v966
    %v982 = vsel %vm947, %v980, %v968
    %v983 = vsel %vm950, %v981, %v974
    %v984 = vsel %vm950, %v982, %v976
    %v985 = vpack.c.bf16 %v984, %v983
    %v986 = vld [vmem:[%s3] sm:$0xff]
    %v987 = vld [vmem:[%s3 + $0x8] sm:$0xff]
    %v988 = vld [vmem:[%s3 + $0x10] sm:$0xff]
    %v989 = vld [vmem:[%s3 + $0x18] sm:$0xff]
    %v990 = vld [vmem:[%s3 + $0x20] sm:$0xff]
    %v991 = vld [vmem:[%s3 + $0x28] sm:$0xff]
    %v992 = vld [vmem:[%s3 + $0x30] sm:$0xff]
    %v993 = vld [vmem:[%s3 + $0x38] sm:$0xff]
    %v994 = vld [vmem:[%s4] sm:$0xff]
    %v996 = vlaneseq
    %v997 = vshrl.u32 %v996, 7
    %v998 = vsub.s32 0, %v997
    %v999 = vrot.slane %v994, %v998
    %v1000 = vlaneseq
    %v1001 = vshrl.u32 %v1000, 7
    %v1002 = vsub.s32 1, %v1001
    %v1003 = vrot.slane %v994, %v1002
    %v1004 = vlaneseq
    %v1005 = vshrl.u32 %v1004, 7
    %v1006 = vsub.s32 2, %v1005
    %v1007 = vrot.slane %v994, %v1006
    %v1008 = vlaneseq
    %v1009 = vshrl.u32 %v1008, 7
    %v1010 = vsub.s32 3, %v1009
    %v1011 = vrot.slane %v994, %v1010
    %v1012 = vlaneseq
    %v1013 = vshrl.u32 %v1012, 7
    %v1014 = vsub.s32 4, %v1013
    %v1015 = vrot.slane %v994, %v1014
    %v1016 = vlaneseq
    %v1017 = vshrl.u32 %v1016, 7
    %v1018 = vsub.s32 5, %v1017
    %v1019 = vrot.slane %v994, %v1018
    %v1020 = vlaneseq
    %v1021 = vshrl.u32 %v1020, 7
    %v1022 = vsub.s32 6, %v1021
    %v1023 = vrot.slane %v994, %v1022
    %v1024 = vlaneseq
    %v1025 = vshrl.u32 %v1024, 7
    %v1026 = vsub.s32 7, %v1025
    %v1027 = vrot.slane %v994, %v1026
    %v1044 = vunpack.c.l.b16 %v986
    %v1045 = vunpack.c.h.b16 %v986
    %v1046 = vunpack.c.l.b16 %v987
    %v1047 = vunpack.c.h.b16 %v987
    %v1048 = vunpack.c.l.b16 %v988
    %v1049 = vunpack.c.h.b16 %v988
    %v1050 = vunpack.c.l.b16 %v989
    %v1051 = vunpack.c.h.b16 %v989
    %v1052 = vunpack.c.l.b16 %v990
    %v1053 = vunpack.c.h.b16 %v990
    %v1054 = vunpack.c.l.b16 %v991
    %v1055 = vunpack.c.h.b16 %v991
    %v1056 = vunpack.c.l.b16 %v992
    %v1057 = vunpack.c.h.b16 %v992
    %v1058 = vunpack.c.l.b16 %v993
    %v1059 = vunpack.c.h.b16 %v993
    %v1060 = vpack.c.b16 %v1052, %v1044
    %v1061 = vpack.c.b16 %v1053, %v1045
    %v1062 = vpack.c.b16 %v1054, %v1046
    %v1063 = vpack.c.b16 %v1055, %v1047
    %v1064 = vpack.c.b16 %v1056, %v1048
    %v1065 = vpack.c.b16 %v1057, %v1049
    %v1066 = vpack.c.b16 %v1058, %v1050
    %v1067 = vpack.c.b16 %v1059, %v1051
    %v1077 = vsel %vm493, %v985, 0
    %1079 = vmatprep.subr.bf16.mxu0 %v1061
    %1080 = vmatpush1.bf16.msra.mxu0 %v1060
    %1081 = vmatprep.subr.bf16.mxu0 0
    %1082 = vmatpush1.bf16.msra.mxu0 0
    %1083 = vmatprep.subr.bf16.mxu0 0
    %1084 = vmatpush1.bf16.msra.mxu0 0
    %1085 = vmatprep.subr.bf16.mxu0 0
    %1086 = vmatpush1.bf16.msra.mxu0 0
    %1087 = vmatprep.subr.bf16.mxu0 0
    %1088 = vmatpush1.bf16.msra.mxu0 0
    %1089 = vmatprep.subr.bf16.mxu0 0
    %1090 = vmatpush1.bf16.msra.mxu0 0
    %1091 = vmatprep.subr.bf16.mxu0 0
    %1092 = vmatpush1.bf16.msra.mxu0 0
    %1093 = vmatprep.subr.bf16.mxu0 0
    %1094 = vmatpush1.bf16.msra.mxu0 0
    %1095 = vmatprep.subr.bf16.mxu0 0
    %1096 = vmatpush1.bf16.msra.mxu0 0
    %1097 = vmatprep.subr.bf16.mxu0 0
    %1098 = vmatpush1.bf16.msra.mxu0 0
    %1099 = vmatprep.subr.bf16.mxu0 0
    %1100 = vmatpush1.bf16.msra.mxu0 0
    %1101 = vmatprep.subr.bf16.mxu0 0
    %1102 = vmatpush1.bf16.msra.mxu0 0
    %1103 = vmatprep.subr.bf16.mxu0 0
    %1104 = vmatpush1.bf16.msra.mxu0 0
    %1105 = vmatprep.subr.bf16.mxu0 0
    %1106 = vmatpush1.bf16.msra.mxu0 0
    %1107 = vmatprep.subr.bf16.mxu0 0
    %1108 = vmatpush1.bf16.msra.mxu0 0
    %1109 = vmatprep.subr.bf16.mxu0 0
    %1110 = vmatpush1.bf16.msra.mxu0 0
    %1111 = vmatprep.mubr.bf16.mxu0 0
    %1112 = vmatmul.mubr.bf16.gmra.mrb[0].mxu0 %v1077
    %v1113 = vpop.f32.mrb[0].mxu0
    %v1114 = vadd.f32 %v999, %v1113
    %v1115 = vpop.f32.mrb[0].mxu0
    %v1116 = vadd.f32 %v1003, %v1115
    %v1117 = vpop.f32.mrb[0].mxu0
    %v1118 = vadd.f32 %v999, %v1117
    %v1119 = vpop.f32.mrb[0].mxu0
    %v1120 = vadd.f32 %v1003, %v1119
    %1121 = vdwg.mxu0
    %1122 = vmatprep.subr.bf16.mxu0 %v1063
    %1123 = vmatpush1.bf16.msra.mxu0 %v1062
    %1124 = vmatprep.subr.bf16.mxu0 0
    %1125 = vmatpush1.bf16.msra.mxu0 0
    %1126 = vmatprep.subr.bf16.mxu0 0
    %1127 = vmatpush1.bf16.msra.mxu0 0
    %1128 = vmatprep.subr.bf16.mxu0 0
    %1129 = vmatpush1.bf16.msra.mxu0 0
    %1130 = vmatprep.subr.bf16.mxu0 0
    %1131 = vmatpush1.bf16.msra.mxu0 0
    %1132 = vmatprep.subr.bf16.mxu0 0
    %1133 = vmatpush1.bf16.msra.mxu0 0
    %1134 = vmatprep.subr.bf16.mxu0 0
    %1135 = vmatpush1.bf16.msra.mxu0 0
    %1136 = vmatprep.subr.bf16.mxu0 0
    %1137 = vmatpush1.bf16.msra.mxu0 0
    %1138 = vmatprep.subr.bf16.mxu0 0
    %1139 = vmatpush1.bf16.msra.mxu0 0
    %1140 = vmatprep.subr.bf16.mxu0 0
    %1141 = vmatpush1.bf16.msra.mxu0 0
    %1142 = vmatprep.subr.bf16.mxu0 0
    %1143 = vmatpush1.bf16.msra.mxu0 0
    %1144 = vmatprep.subr.bf16.mxu0 0
    %1145 = vmatpush1.bf16.msra.mxu0 0
    %1146 = vmatprep.subr.bf16.mxu0 0
    %1147 = vmatpush1.bf16.msra.mxu0 0
    %1148 = vmatprep.subr.bf16.mxu0 0
    %1149 = vmatpush1.bf16.msra.mxu0 0
    %1150 = vmatprep.subr.bf16.mxu0 0
    %1151 = vmatpush1.bf16.msra.mxu0 0
    %1152 = vmatprep.subr.bf16.mxu0 0
    %1153 = vmatpush1.bf16.msra.mxu0 0
    %1154 = vmatprep.mubr.bf16.mxu0 0
    %1155 = vmatmul.mubr.bf16.gmra.mrb[0].mxu0 %v1077
    %v1156 = vpop.f32.mrb[0].mxu0
    %v1157 = vadd.f32 %v1007, %v1156
    %v1158 = vpop.f32.mrb[0].mxu0
    %v1159 = vadd.f32 %v1011, %v1158
    %v1160 = vpop.f32.mrb[0].mxu0
    %v1161 = vadd.f32 %v1007, %v1160
    %v1162 = vpop.f32.mrb[0].mxu0
    %v1163 = vadd.f32 %v1011, %v1162
    %1164 = vdwg.mxu0
    %1165 = vmatprep.subr.bf16.mxu0 %v1065
    %1166 = vmatpush1.bf16.msra.mxu0 %v1064
    %1167 = vmatprep.subr.bf16.mxu0 0
    %1168 = vmatpush1.bf16.msra.mxu0 0
    %1169 = vmatprep.subr.bf16.mxu0 0
    %1170 = vmatpush1.bf16.msra.mxu0 0
    %1171 = vmatprep.subr.bf16.mxu0 0
    %1172 = vmatpush1.bf16.msra.mxu0 0
    %1173 = vmatprep.subr.bf16.mxu0 0
    %1174 = vmatpush1.bf16.msra.mxu0 0
    %1175 = vmatprep.subr.bf16.mxu0 0
    %1176 = vmatpush1.bf16.msra.mxu0 0
    %1177 = vmatprep.subr.bf16.mxu0 0
    %1178 = vmatpush1.bf16.msra.mxu0 0
    %1179 = vmatprep.subr.bf16.mxu0 0
    %1180 = vmatpush1.bf16.msra.mxu0 0
    %1181 = vmatprep.subr.bf16.mxu0 0
    %1182 = vmatpush1.bf16.msra.mxu0 0
    %1183 = vmatprep.subr.bf16.mxu0 0
    %1184 = vmatpush1.bf16.msra.mxu0 0
    %1185 = vmatprep.subr.bf16.mxu0 0
    %1186 = vmatpush1.bf16.msra.mxu0 0
    %1187 = vmatprep.subr.bf16.mxu0 0
    %1188 = vmatpush1.bf16.msra.mxu0 0
    %1189 = vmatprep.subr.bf16.mxu0 0
    %1190 = vmatpush1.bf16.msra.mxu0 0
    %1191 = vmatprep.subr.bf16.mxu0 0
    %1192 = vmatpush1.bf16.msra.mxu0 0
    %1193 = vmatprep.subr.bf16.mxu0 0
    %1194 = vmatpush1.bf16.msra.mxu0 0
    %1195 = vmatprep.subr.bf16.mxu0 0
    %1196 = vmatpush1.bf16.msra.mxu0 0
    %1197 = vmatprep.mubr.bf16.mxu0 0
    %1198 = vmatmul.mubr.bf16.gmra.mrb[0].mxu0 %v1077
    %v1199 = vpop.f32.mrb[0].mxu0
    %v1200 = vadd.f32 %v1015, %v1199
    %v1201 = vpop.f32.mrb[0].mxu0
    %v1202 = vadd.f32 %v1019, %v1201
    %v1203 = vpop.f32.mrb[0].mxu0
    %v1204 = vadd.f32 %v1015, %v1203
    %v1205 = vpop.f32.mrb[0].mxu0
    %v1206 = vadd.f32 %v1019, %v1205
    %1207 = vdwg.mxu0
    %1208 = vmatprep.subr.bf16.mxu0 %v1067
    %1209 = vmatpush1.bf16.msra.mxu0 %v1066
    %1210 = vmatprep.subr.bf16.mxu0 0
    %1211 = vmatpush1.bf16.msra.mxu0 0
    %1212 = vmatprep.subr.bf16.mxu0 0
    %1213 = vmatpush1.bf16.msra.mxu0 0
    %1214 = vmatprep.subr.bf16.mxu0 0
    %1215 = vmatpush1.bf16.msra.mxu0 0
    %1216 = vmatprep.subr.bf16.mxu0 0
    %1217 = vmatpush1.bf16.msra.mxu0 0
    %1218 = vmatprep.subr.bf16.mxu0 0
    %1219 = vmatpush1.bf16.msra.mxu0 0
    %1220 = vmatprep.subr.bf16.mxu0 0
    %1221 = vmatpush1.bf16.msra.mxu0 0
    %1222 = vmatprep.subr.bf16.mxu0 0
    %1223 = vmatpush1.bf16.msra.mxu0 0
    %1224 = vmatprep.subr.bf16.mxu0 0
    %1225 = vmatpush1.bf16.msra.mxu0 0
    %1226 = vmatprep.subr.bf16.mxu0 0
    %1227 = vmatpush1.bf16.msra.mxu0 0
    %1228 = vmatprep.subr.bf16.mxu0 0
    %1229 = vmatpush1.bf16.msra.mxu0 0
    %1230 = vmatprep.subr.bf16.mxu0 0
    %1231 = vmatpush1.bf16.msra.mxu0 0
    %1232 = vmatprep.subr.bf16.mxu0 0
    %1233 = vmatpush1.bf16.msra.mxu0 0
    %1234 = vmatprep.subr.bf16.mxu0 0
    %1235 = vmatpush1.bf16.msra.mxu0 0
    %1236 = vmatprep.subr.bf16.mxu0 0
    %1237 = vmatpush1.bf16.msra.mxu0 0
    %1238 = vmatprep.subr.bf16.mxu0 0
    %1239 = vmatpush1.bf16.msra.mxu0 0
    %1240 = vmatprep.mubr.bf16.mxu0 0
    %1241 = vmatmul.mubr.bf16.gmra.mrb[0].mxu0 %v1077
    %v1242 = vpop.f32.mrb[0].mxu0
    %v1243 = vadd.f32 %v1023, %v1242
    %v1244 = vpop.f32.mrb[0].mxu0
    %v1245 = vadd.f32 %v1027, %v1244
    %v1246 = vpop.f32.mrb[0].mxu0
    %v1247 = vadd.f32 %v1023, %v1246
    %v1248 = vpop.f32.mrb[0].mxu0
    %v1249 = vadd.f32 %v1027, %v1248
    %1250 = vdwg.mxu0
    %v1251 = vmax.f32 %v1114, 0.0
    %v1252 = vmax.f32 %v1116, 0.0
    %v1253 = vmax.f32 %v1157, 0.0
    %v1254 = vmax.f32 %v1159, 0.0
    %v1255 = vmax.f32 %v1200, 0.0
    %v1256 = vmax.f32 %v1202, 0.0
    %v1257 = vmax.f32 %v1243, 0.0
    %v1258 = vmax.f32 %v1245, 0.0
    %v1259 = vmax.f32 %v1118, 0.0
    %v1260 = vmax.f32 %v1120, 0.0
    %v1261 = vmax.f32 %v1161, 0.0
    %v1262 = vmax.f32 %v1163, 0.0
    %v1263 = vmax.f32 %v1204, 0.0
    %v1264 = vmax.f32 %v1206, 0.0
    %v1265 = vmax.f32 %v1247, 0.0
    %v1266 = vmax.f32 %v1249, 0.0
    %v1267 = vpack.c.bf16 %v1259, %v1251
    %v1268 = vpack.c.bf16 %v1260, %v1252
    %v1269 = vpack.c.bf16 %v1261, %v1253
    %v1270 = vpack.c.bf16 %v1262, %v1254
    %v1271 = vpack.c.bf16 %v1263, %v1255
    %v1272 = vpack.c.bf16 %v1264, %v1256
    %v1273 = vpack.c.bf16 %v1265, %v1257
    %v1274 = vpack.c.bf16 %v1266, %v1258
    %v1275 = vld [vmem:[#allocation2] sm:$0xff]
    %v1276 = vld [vmem:[#allocation2 + $0x8] sm:$0xff]
    %v1277 = vld [vmem:[#allocation2 + $0x10] sm:$0xff]
    %v1278 = vld [vmem:[#allocation2 + $0x18] sm:$0xff]
    %v1279 = vld [vmem:[#allocation2 + $0x20] sm:$0xff]
    %v1280 = vld [vmem:[#allocation2 + $0x28] sm:$0xff]
    %v1281 = vld [vmem:[#allocation2 + $0x30] sm:$0xff]
    %v1282 = vld [vmem:[#allocation2 + $0x38] sm:$0xff]
    %v1283 = vld [vmem:[#allocation2 + $0x40] sm:$0xff]
    %v1284 = vld [vmem:[#allocation2 + $0x48] sm:$0xff]
    %v1285 = vld [vmem:[#allocation2 + $0x50] sm:$0xff]
    %v1286 = vld [vmem:[#allocation2 + $0x58] sm:$0xff]
    %v1287 = vld [vmem:[#allocation2 + $0x60] sm:$0xff]
    %v1288 = vld [vmem:[#allocation2 + $0x68] sm:$0xff]
    %v1289 = vld [vmem:[#allocation2 + $0x70] sm:$0xff]
    %v1290 = vld [vmem:[#allocation2 + $0x78] sm:$0xff]
    %v1291 = vld [vmem:[#allocation2 + $0x80] sm:$0xff]
    %v1292 = vld [vmem:[#allocation2 + $0x88] sm:$0xff]
    %v1293 = vld [vmem:[#allocation2 + $0x90] sm:$0xff]
    %v1294 = vld [vmem:[#allocation2 + $0x98] sm:$0xff]
    %v1295 = vld [vmem:[#allocation2 + $0xa0] sm:$0xff]
    %v1296 = vld [vmem:[#allocation2 + $0xa8] sm:$0xff]
    %v1297 = vld [vmem:[#allocation2 + $0xb0] sm:$0xff]
    %v1298 = vld [vmem:[#allocation2 + $0xb8] sm:$0xff]
    %v1299 = vld [vmem:[#allocation2 + $0xc0] sm:$0xff]
    %v1300 = vld [vmem:[#allocation2 + $0xc8] sm:$0xff]
    %v1301 = vld [vmem:[#allocation2 + $0xd0] sm:$0xff]
    %v1302 = vld [vmem:[#allocation2 + $0xd8] sm:$0xff]
    %v1303 = vld [vmem:[#allocation2 + $0xe0] sm:$0xff]
    %v1304 = vld [vmem:[#allocation2 + $0xe8] sm:$0xff]
    %v1305 = vld [vmem:[#allocation2 + $0xf0] sm:$0xff]
    %v1306 = vld [vmem:[#allocation2 + $0xf8] sm:$0xff]
    %v1307 = vld [vmem:[#allocation2 + $0x100] sm:$0xff]
    %v1308 = vld [vmem:[#allocation2 + $0x108] sm:$0xff]
    %v1309 = vld [vmem:[#allocation2 + $0x110] sm:$0xff]
    %v1310 = vld [vmem:[#allocation2 + $0x118] sm:$0xff]
    %v1311 = vld [vmem:[#allocation2 + $0x120] sm:$0xff]
    %v1312 = vld [vmem:[#allocation2 + $0x128] sm:$0xff]
    %v1313 = vld [vmem:[#allocation2 + $0x130] sm:$0xff]
    %v1314 = vld [vmem:[#allocation2 + $0x138] sm:$0xff]
    %v1315 = vld [vmem:[#allocation2 + $0x140] sm:$0xff]
    %v1316 = vld [vmem:[#allocation2 + $0x148] sm:$0xff]
    %v1317 = vld [vmem:[#allocation2 + $0x150] sm:$0xff]
    %v1318 = vld [vmem:[#allocation2 + $0x158] sm:$0xff]
    %v1319 = vld [vmem:[#allocation2 + $0x160] sm:$0xff]
    %v1320 = vld [vmem:[#allocation2 + $0x168] sm:$0xff]
    %v1321 = vld [vmem:[#allocation2 + $0x170] sm:$0xff]
    %v1322 = vld [vmem:[#allocation2 + $0x178] sm:$0xff]
    %v1323 = vld [vmem:[#allocation2 + $0x180] sm:$0xff]
    %v1324 = vld [vmem:[#allocation2 + $0x188] sm:$0xff]
    %v1325 = vld [vmem:[#allocation2 + $0x190] sm:$0xff]
    %v1326 = vld [vmem:[#allocation2 + $0x198] sm:$0xff]
    %v1327 = vld [vmem:[#allocation2 + $0x1a0] sm:$0xff]
    %v1328 = vld [vmem:[#allocation2 + $0x1a8] sm:$0xff]
    %v1329 = vld [vmem:[#allocation2 + $0x1b0] sm:$0xff]
    %v1330 = vld [vmem:[#allocation2 + $0x1b8] sm:$0xff]
    %v1331 = vld [vmem:[#allocation2 + $0x1c0] sm:$0xff]
    %v1332 = vld [vmem:[#allocation2 + $0x1c8] sm:$0xff]
    %v1333 = vld [vmem:[#allocation2 + $0x1d0] sm:$0xff]
    %v1334 = vld [vmem:[#allocation2 + $0x1d8] sm:$0xff]
    %v1335 = vld [vmem:[#allocation2 + $0x1e0] sm:$0xff]
    %v1336 = vld [vmem:[#allocation2 + $0x1e8] sm:$0xff]
    %v1337 = vld [vmem:[#allocation2 + $0x1f0] sm:$0xff]
    %v1338 = vld [vmem:[#allocation2 + $0x1f8] sm:$0xff]
    %v1339 = vld [vmem:[#allocation2 + $0x200] sm:$0xff]
    %v1340 = vld [vmem:[#allocation2 + $0x208] sm:$0xff]
    %v1341 = vld [vmem:[#allocation2 + $0x210] sm:$0xff]
    %v1342 = vld [vmem:[#allocation2 + $0x218] sm:$0xff]
    %v1343 = vld [vmem:[#allocation2 + $0x220] sm:$0xff]
    %v1344 = vld [vmem:[#allocation2 + $0x228] sm:$0xff]
    %v1345 = vld [vmem:[#allocation2 + $0x230] sm:$0xff]
    %v1346 = vld [vmem:[#allocation2 + $0x238] sm:$0xff]
    %v1347 = vld [vmem:[#allocation2 + $0x240] sm:$0xff]
    %v1348 = vld [vmem:[#allocation2 + $0x248] sm:$0xff]
    %v1349 = vld [vmem:[#allocation2 + $0x250] sm:$0xff]
    %v1350 = vld [vmem:[#allocation2 + $0x258] sm:$0xff]
    %v1351 = vld [vmem:[#allocation2 + $0x260] sm:$0xff]
    %v1352 = vld [vmem:[#allocation2 + $0x268] sm:$0xff]
    %v1353 = vld [vmem:[#allocation2 + $0x270] sm:$0xff]
    %v1354 = vld [vmem:[#allocation2 + $0x278] sm:$0xff]
    %v1355 = vld [vmem:[#allocation2 + $0x280] sm:$0xff]
    %v1356 = vld [vmem:[#allocation2 + $0x288] sm:$0xff]
    %v1357 = vld [vmem:[#allocation2 + $0x290] sm:$0xff]
    %v1358 = vld [vmem:[#allocation2 + $0x298] sm:$0xff]
    %v1359 = vld [vmem:[#allocation2 + $0x2a0] sm:$0xff]
    %v1360 = vld [vmem:[#allocation2 + $0x2a8] sm:$0xff]
    %v1361 = vld [vmem:[#allocation2 + $0x2b0] sm:$0xff]
    %v1362 = vld [vmem:[#allocation2 + $0x2b8] sm:$0xff]
    %v1363 = vld [vmem:[#allocation2 + $0x2c0] sm:$0xff]
    %v1364 = vld [vmem:[#allocation2 + $0x2c8] sm:$0xff]
    %v1365 = vld [vmem:[#allocation2 + $0x2d0] sm:$0xff]
    %v1366 = vld [vmem:[#allocation2 + $0x2d8] sm:$0xff]
    %v1367 = vld [vmem:[#allocation2 + $0x2e0] sm:$0xff]
    %v1368 = vld [vmem:[#allocation2 + $0x2e8] sm:$0xff]
    %v1369 = vld [vmem:[#allocation2 + $0x2f0] sm:$0xff]
    %v1370 = vld [vmem:[#allocation2 + $0x2f8] sm:$0xff]
    %v1371 = vld [vmem:[#allocation2 + $0x300] sm:$0xff]
    %v1372 = vld [vmem:[#allocation2 + $0x308] sm:$0xff]
    %v1373 = vld [vmem:[#allocation2 + $0x310] sm:$0xff]
    %v1374 = vld [vmem:[#allocation2 + $0x318] sm:$0xff]
    %v1375 = vld [vmem:[#allocation2 + $0x320] sm:$0xff]
    %v1376 = vld [vmem:[#allocation2 + $0x328] sm:$0xff]
    %v1377 = vld [vmem:[#allocation2 + $0x330] sm:$0xff]
    %v1378 = vld [vmem:[#allocation2 + $0x338] sm:$0xff]
    %v1379 = vld [vmem:[#allocation2 + $0x340] sm:$0xff]
    %v1380 = vld [vmem:[#allocation2 + $0x348] sm:$0xff]
    %v1381 = vld [vmem:[#allocation2 + $0x350] sm:$0xff]
    %v1382 = vld [vmem:[#allocation2 + $0x358] sm:$0xff]
    %v1383 = vld [vmem:[#allocation2 + $0x360] sm:$0xff]
    %v1384 = vld [vmem:[#allocation2 + $0x368] sm:$0xff]
    %v1385 = vld [vmem:[#allocation2 + $0x370] sm:$0xff]
    %v1386 = vld [vmem:[#allocation2 + $0x378] sm:$0xff]
    %v1387 = vld [vmem:[#allocation2 + $0x380] sm:$0xff]
    %v1388 = vld [vmem:[#allocation2 + $0x388] sm:$0xff]
    %v1389 = vld [vmem:[#allocation2 + $0x390] sm:$0xff]
    %v1390 = vld [vmem:[#allocation2 + $0x398] sm:$0xff]
    %v1391 = vld [vmem:[#allocation2 + $0x3a0] sm:$0xff]
    %v1392 = vld [vmem:[#allocation2 + $0x3a8] sm:$0xff]
    %v1393 = vld [vmem:[#allocation2 + $0x3b0] sm:$0xff]
    %v1394 = vld [vmem:[#allocation2 + $0x3b8] sm:$0xff]
    %v1395 = vld [vmem:[#allocation2 + $0x3c0] sm:$0xff]
    %v1396 = vld [vmem:[#allocation2 + $0x3c8] sm:$0xff]
    %v1397 = vld [vmem:[#allocation2 + $0x3d0] sm:$0xff]
    %v1398 = vld [vmem:[#allocation2 + $0x3d8] sm:$0xff]
    %v1399 = vld [vmem:[#allocation2 + $0x3e0] sm:$0xff]
    %v1400 = vld [vmem:[#allocation2 + $0x3e8] sm:$0xff]
    %v1401 = vld [vmem:[#allocation2 + $0x3f0] sm:$0xff]
    %v1402 = vld [vmem:[#allocation2 + $0x3f8] sm:$0xff]
    %v1403 = vld [vmem:[%s6] sm:$0x3]
    %v1405 = vlaneseq
    %v1406 = vshrl.u32 %v1405, 7
    %v1407 = vsub.s32 0, %v1406
    %v1408 = vrot.slane %v1403, %v1407
    %v1409 = vlaneseq
    %v1410 = vshrl.u32 %v1409, 7
    %v1411 = vsub.s32 1, %v1410
    %v1412 = vrot.slane %v1403, %v1411
    %v1543 = vunpack.c.l.b16 %v1275
    %v1544 = vunpack.c.h.b16 %v1275
    %v1545 = vunpack.c.l.b16 %v1276
    %v1546 = vunpack.c.h.b16 %v1276
    %v1547 = vunpack.c.l.b16 %v1277
    %v1548 = vunpack.c.h.b16 %v1277
    %v1549 = vunpack.c.l.b16 %v1278
    %v1550 = vunpack.c.h.b16 %v1278
    %v1551 = vunpack.c.l.b16 %v1279
    %v1552 = vunpack.c.h.b16 %v1279
    %v1553 = vunpack.c.l.b16 %v1280
    %v1554 = vunpack.c.h.b16 %v1280
    %v1555 = vunpack.c.l.b16 %v1281
    %v1556 = vunpack.c.h.b16 %v1281
    %v1557 = vunpack.c.l.b16 %v1282
    %v1558 = vunpack.c.h.b16 %v1282
    %v1559 = vunpack.c.l.b16 %v1283
    %v1560 = vunpack.c.h.b16 %v1283
    %v1561 = vunpack.c.l.b16 %v1284
    %v1562 = vunpack.c.h.b16 %v1284
    %v1563 = vunpack.c.l.b16 %v1285
    %v1564 = vunpack.c.h.b16 %v1285
    %v1565 = vunpack.c.l.b16 %v1286
    %v1566 = vunpack.c.h.b16 %v1286
    %v1567 = vunpack.c.l.b16 %v1287
    %v1568 = vunpack.c.h.b16 %v1287
    %v1569 = vunpack.c.l.b16 %v1288
    %v1570 = vunpack.c.h.b16 %v1288
    %v1571 = vunpack.c.l.b16 %v1289
    %v1572 = vunpack.c.h.b16 %v1289
    %v1573 = vunpack.c.l.b16 %v1290
    %v1574 = vunpack.c.h.b16 %v1290
    %v1575 = vunpack.c.l.b16 %v1291
    %v1576 = vunpack.c.h.b16 %v1291
    %v1577 = vunpack.c.l.b16 %v1292
    %v1578 = vunpack.c.h.b16 %v1292
    %v1579 = vunpack.c.l.b16 %v1293
    %v1580 = vunpack.c.h.b16 %v1293
    %v1581 = vunpack.c.l.b16 %v1294
    %v1582 = vunpack.c.h.b16 %v1294
    %v1583 = vunpack.c.l.b16 %v1295
    %v1584 = vunpack.c.h.b16 %v1295
    %v1585 = vunpack.c.l.b16 %v1296
    %v1586 = vunpack.c.h.b16 %v1296
    %v1587 = vunpack.c.l.b16 %v1297
    %v1588 = vunpack.c.h.b16 %v1297
    %v1589 = vunpack.c.l.b16 %v1298
    %v1590 = vunpack.c.h.b16 %v1298
    %v1591 = vunpack.c.l.b16 %v1299
    %v1592 = vunpack.c.h.b16 %v1299
    %v1593 = vunpack.c.l.b16 %v1300
    %v1594 = vunpack.c.h.b16 %v1300
    %v1595 = vunpack.c.l.b16 %v1301
    %v1596 = vunpack.c.h.b16 %v1301
    %v1597 = vunpack.c.l.b16 %v1302
    %v1598 = vunpack.c.h.b16 %v1302
    %v1599 = vunpack.c.l.b16 %v1303
    %v1600 = vunpack.c.h.b16 %v1303
    %v1601 = vunpack.c.l.b16 %v1304
    %v1602 = vunpack.c.h.b16 %v1304
    %v1603 = vunpack.c.l.b16 %v1305
    %v1604 = vunpack.c.h.b16 %v1305
    %v1605 = vunpack.c.l.b16 %v1306
    %v1606 = vunpack.c.h.b16 %v1306
    %v1607 = vunpack.c.l.b16 %v1307
    %v1608 = vunpack.c.h.b16 %v1307
    %v1609 = vunpack.c.l.b16 %v1308
    %v1610 = vunpack.c.h.b16 %v1308
    %v1611 = vunpack.c.l.b16 %v1309
    %v1612 = vunpack.c.h.b16 %v1309
    %v1613 = vunpack.c.l.b16 %v1310
    %v1614 = vunpack.c.h.b16 %v1310
    %v1615 = vunpack.c.l.b16 %v1311
    %v1616 = vunpack.c.h.b16 %v1311
    %v1617 = vunpack.c.l.b16 %v1312
    %v1618 = vunpack.c.h.b16 %v1312
    %v1619 = vunpack.c.l.b16 %v1313
    %v1620 = vunpack.c.h.b16 %v1313
    %v1621 = vunpack.c.l.b16 %v1314
    %v1622 = vunpack.c.h.b16 %v1314
    %v1623 = vunpack.c.l.b16 %v1315
    %v1624 = vunpack.c.h.b16 %v1315
    %v1625 = vunpack.c.l.b16 %v1316
    %v1626 = vunpack.c.h.b16 %v1316
    %v1627 = vunpack.c.l.b16 %v1317
    %v1628 = vunpack.c.h.b16 %v1317
    %v1629 = vunpack.c.l.b16 %v1318
    %v1630 = vunpack.c.h.b16 %v1318
    %v1631 = vunpack.c.l.b16 %v1319
    %v1632 = vunpack.c.h.b16 %v1319
    %v1633 = vunpack.c.l.b16 %v1320
    %v1634 = vunpack.c.h.b16 %v1320
    %v1635 = vunpack.c.l.b16 %v1321
    %v1636 = vunpack.c.h.b16 %v1321
    %v1637 = vunpack.c.l.b16 %v1322
    %v1638 = vunpack.c.h.b16 %v1322
    %v1639 = vunpack.c.l.b16 %v1323
    %v1640 = vunpack.c.h.b16 %v1323
    %v1641 = vunpack.c.l.b16 %v1324
    %v1642 = vunpack.c.h.b16 %v1324
    %v1643 = vunpack.c.l.b16 %v1325
    %v1644 = vunpack.c.h.b16 %v1325
    %v1645 = vunpack.c.l.b16 %v1326
    %v1646 = vunpack.c.h.b16 %v1326
    %v1647 = vunpack.c.l.b16 %v1327
    %v1648 = vunpack.c.h.b16 %v1327
    %v1649 = vunpack.c.l.b16 %v1328
    %v1650 = vunpack.c.h.b16 %v1328
    %v1651 = vunpack.c.l.b16 %v1329
    %v1652 = vunpack.c.h.b16 %v1329
    %v1653 = vunpack.c.l.b16 %v1330
    %v1654 = vunpack.c.h.b16 %v1330
    %v1655 = vunpack.c.l.b16 %v1331
    %v1656 = vunpack.c.h.b16 %v1331
    %v1657 = vunpack.c.l.b16 %v1332
    %v1658 = vunpack.c.h.b16 %v1332
    %v1659 = vunpack.c.l.b16 %v1333
    %v1660 = vunpack.c.h.b16 %v1333
    %v1661 = vunpack.c.l.b16 %v1334
    %v1662 = vunpack.c.h.b16 %v1334
    %v1663 = vunpack.c.l.b16 %v1335
    %v1664 = vunpack.c.h.b16 %v1335
    %v1665 = vunpack.c.l.b16 %v1336
    %v1666 = vunpack.c.h.b16 %v1336
    %v1667 = vunpack.c.l.b16 %v1337
    %v1668 = vunpack.c.h.b16 %v1337
    %v1669 = vunpack.c.l.b16 %v1338
    %v1670 = vunpack.c.h.b16 %v1338
    %v1671 = vunpack.c.l.b16 %v1339
    %v1672 = vunpack.c.h.b16 %v1339
    %v1673 = vunpack.c.l.b16 %v1340
    %v1674 = vunpack.c.h.b16 %v1340
    %v1675 = vunpack.c.l.b16 %v1341
    %v1676 = vunpack.c.h.b16 %v1341
    %v1677 = vunpack.c.l.b16 %v1342
    %v1678 = vunpack.c.h.b16 %v1342
    %v1679 = vunpack.c.l.b16 %v1343
    %v1680 = vunpack.c.h.b16 %v1343
    %v1681 = vunpack.c.l.b16 %v1344
    %v1682 = vunpack.c.h.b16 %v1344
    %v1683 = vunpack.c.l.b16 %v1345
    %v1684 = vunpack.c.h.b16 %v1345
    %v1685 = vunpack.c.l.b16 %v1346
    %v1686 = vunpack.c.h.b16 %v1346
    %v1687 = vunpack.c.l.b16 %v1347
    %v1688 = vunpack.c.h.b16 %v1347
    %v1689 = vunpack.c.l.b16 %v1348
    %v1690 = vunpack.c.h.b16 %v1348
    %v1691 = vunpack.c.l.b16 %v1349
    %v1692 = vunpack.c.h.b16 %v1349
    %v1693 = vunpack.c.l.b16 %v1350
    %v1694 = vunpack.c.h.b16 %v1350
    %v1695 = vunpack.c.l.b16 %v1351
    %v1696 = vunpack.c.h.b16 %v1351
    %v1697 = vunpack.c.l.b16 %v1352
    %v1698 = vunpack.c.h.b16 %v1352
    %v1699 = vunpack.c.l.b16 %v1353
    %v1700 = vunpack.c.h.b16 %v1353
    %v1701 = vunpack.c.l.b16 %v1354
    %v1702 = vunpack.c.h.b16 %v1354
    %v1703 = vunpack.c.l.b16 %v1355
    %v1704 = vunpack.c.h.b16 %v1355
    %v1705 = vunpack.c.l.b16 %v1356
    %v1706 = vunpack.c.h.b16 %v1356
    %v1707 = vunpack.c.l.b16 %v1357
    %v1708 = vunpack.c.h.b16 %v1357
    %v1709 = vunpack.c.l.b16 %v1358
    %v1710 = vunpack.c.h.b16 %v1358
    %v1711 = vunpack.c.l.b16 %v1359
    %v1712 = vunpack.c.h.b16 %v1359
    %v1713 = vunpack.c.l.b16 %v1360
    %v1714 = vunpack.c.h.b16 %v1360
    %v1715 = vunpack.c.l.b16 %v1361
    %v1716 = vunpack.c.h.b16 %v1361
    %v1717 = vunpack.c.l.b16 %v1362
    %v1718 = vunpack.c.h.b16 %v1362
    %v1719 = vunpack.c.l.b16 %v1363
    %v1720 = vunpack.c.h.b16 %v1363
    %v1721 = vunpack.c.l.b16 %v1364
    %v1722 = vunpack.c.h.b16 %v1364
    %v1723 = vunpack.c.l.b16 %v1365
    %v1724 = vunpack.c.h.b16 %v1365
    %v1725 = vunpack.c.l.b16 %v1366
    %v1726 = vunpack.c.h.b16 %v1366
    %v1727 = vunpack.c.l.b16 %v1367
    %v1728 = vunpack.c.h.b16 %v1367
    %v1729 = vunpack.c.l.b16 %v1368
    %v1730 = vunpack.c.h.b16 %v1368
    %v1731 = vunpack.c.l.b16 %v1369
    %v1732 = vunpack.c.h.b16 %v1369
    %v1733 = vunpack.c.l.b16 %v1370
    %v1734 = vunpack.c.h.b16 %v1370
    %v1735 = vunpack.c.l.b16 %v1371
    %v1736 = vunpack.c.h.b16 %v1371
    %v1737 = vunpack.c.l.b16 %v1372
    %v1738 = vunpack.c.h.b16 %v1372
    %v1739 = vunpack.c.l.b16 %v1373
    %v1740 = vunpack.c.h.b16 %v1373
    %v1741 = vunpack.c.l.b16 %v1374
    %v1742 = vunpack.c.h.b16 %v1374
    %v1743 = vunpack.c.l.b16 %v1375
    %v1744 = vunpack.c.h.b16 %v1375
    %v1745 = vunpack.c.l.b16 %v1376
    %v1746 = vunpack.c.h.b16 %v1376
    %v1747 = vunpack.c.l.b16 %v1377
    %v1748 = vunpack.c.h.b16 %v1377
    %v1749 = vunpack.c.l.b16 %v1378
    %v1750 = vunpack.c.h.b16 %v1378
    %v1751 = vunpack.c.l.b16 %v1379
    %v1752 = vunpack.c.h.b16 %v1379
    %v1753 = vunpack.c.l.b16 %v1380
    %v1754 = vunpack.c.h.b16 %v1380
    %v1755 = vunpack.c.l.b16 %v1381
    %v1756 = vunpack.c.h.b16 %v1381
    %v1757 = vunpack.c.l.b16 %v1382
    %v1758 = vunpack.c.h.b16 %v1382
    %v1759 = vunpack.c.l.b16 %v1383
    %v1760 = vunpack.c.h.b16 %v1383
    %v1761 = vunpack.c.l.b16 %v1384
    %v1762 = vunpack.c.h.b16 %v1384
    %v1763 = vunpack.c.l.b16 %v1385
    %v1764 = vunpack.c.h.b16 %v1385
    %v1765 = vunpack.c.l.b16 %v1386
    %v1766 = vunpack.c.h.b16 %v1386
    %v1767 = vunpack.c.l.b16 %v1387
    %v1768 = vunpack.c.h.b16 %v1387
    %v1769 = vunpack.c.l.b16 %v1388
    %v1770 = vunpack.c.h.b16 %v1388
    %v1771 = vunpack.c.l.b16 %v1389
    %v1772 = vunpack.c.h.b16 %v1389
    %v1773 = vunpack.c.l.b16 %v1390
    %v1774 = vunpack.c.h.b16 %v1390
    %v1775 = vunpack.c.l.b16 %v1391
    %v1776 = vunpack.c.h.b16 %v1391
    %v1777 = vunpack.c.l.b16 %v1392
    %v1778 = vunpack.c.h.b16 %v1392
    %v1779 = vunpack.c.l.b16 %v1393
    %v1780 = vunpack.c.h.b16 %v1393
    %v1781 = vunpack.c.l.b16 %v1394
    %v1782 = vunpack.c.h.b16 %v1394
    %v1783 = vunpack.c.l.b16 %v1395
    %v1784 = vunpack.c.h.b16 %v1395
    %v1785 = vunpack.c.l.b16 %v1396
    %v1786 = vunpack.c.h.b16 %v1396
    %v1787 = vunpack.c.l.b16 %v1397
    %v1788 = vunpack.c.h.b16 %v1397
    %v1789 = vunpack.c.l.b16 %v1398
    %v1790 = vunpack.c.h.b16 %v1398
    %v1791 = vunpack.c.l.b16 %v1399
    %v1792 = vunpack.c.h.b16 %v1399
    %v1793 = vunpack.c.l.b16 %v1400
    %v1794 = vunpack.c.h.b16 %v1400
    %v1795 = vunpack.c.l.b16 %v1401
    %v1796 = vunpack.c.h.b16 %v1401
    %v1797 = vunpack.c.l.b16 %v1402
    %v1798 = vunpack.c.h.b16 %v1402
    %v1799 = vpack.c.b16 %v1545, %v1543
    %v1800 = vpack.c.b16 %v1546, %v1544
    %v1801 = vpack.c.b16 %v1549, %v1547
    %v1802 = vpack.c.b16 %v1550, %v1548
    %v1803 = vpack.c.b16 %v1553, %v1551
    %v1804 = vpack.c.b16 %v1554, %v1552
    %v1805 = vpack.c.b16 %v1557, %v1555
    %v1806 = vpack.c.b16 %v1558, %v1556
    %v1807 = vpack.c.b16 %v1561, %v1559
    %v1808 = vpack.c.b16 %v1562, %v1560
    %v1809 = vpack.c.b16 %v1565, %v1563
    %v1810 = vpack.c.b16 %v1566, %v1564
    %v1811 = vpack.c.b16 %v1569, %v1567
    %v1812 = vpack.c.b16 %v1570, %v1568
    %v1813 = vpack.c.b16 %v1573, %v1571
    %v1814 = vpack.c.b16 %v1574, %v1572
    %v1815 = vpack.c.b16 %v1577, %v1575
    %v1816 = vpack.c.b16 %v1578, %v1576
    %v1817 = vpack.c.b16 %v1581, %v1579
    %v1818 = vpack.c.b16 %v1582, %v1580
    %v1819 = vpack.c.b16 %v1585, %v1583
    %v1820 = vpack.c.b16 %v1586, %v1584
    %v1821 = vpack.c.b16 %v1589, %v1587
    %v1822 = vpack.c.b16 %v1590, %v1588
    %v1823 = vpack.c.b16 %v1593, %v1591
    %v1824 = vpack.c.b16 %v1594, %v1592
    %v1825 = vpack.c.b16 %v1597, %v1595
    %v1826 = vpack.c.b16 %v1598, %v1596
    %v1827 = vpack.c.b16 %v1601, %v1599
    %v1828 = vpack.c.b16 %v1602, %v1600
    %v1829 = vpack.c.b16 %v1605, %v1603
    %v1830 = vpack.c.b16 %v1606, %v1604
    %v1831 = vpack.c.b16 %v1609, %v1607
    %v1832 = vpack.c.b16 %v1610, %v1608
    %v1833 = vpack.c.b16 %v1613, %v1611
    %v1834 = vpack.c.b16 %v1614, %v1612
    %v1835 = vpack.c.b16 %v1617, %v1615
    %v1836 = vpack.c.b16 %v1618, %v1616
    %v1837 = vpack.c.b16 %v1621, %v1619
    %v1838 = vpack.c.b16 %v1622, %v1620
    %v1839 = vpack.c.b16 %v1625, %v1623
    %v1840 = vpack.c.b16 %v1626, %v1624
    %v1841 = vpack.c.b16 %v1629, %v1627
    %v1842 = vpack.c.b16 %v1630, %v1628
    %v1843 = vpack.c.b16 %v1633, %v1631
    %v1844 = vpack.c.b16 %v1634, %v1632
    %v1845 = vpack.c.b16 %v1637, %v1635
    %v1846 = vpack.c.b16 %v1638, %v1636
    %v1847 = vpack.c.b16 %v1641, %v1639
    %v1848 = vpack.c.b16 %v1642, %v1640
    %v1849 = vpack.c.b16 %v1645, %v1643
    %v1850 = vpack.c.b16 %v1646, %v1644
    %v1851 = vpack.c.b16 %v1649, %v1647
    %v1852 = vpack.c.b16 %v1650, %v1648
    %v1853 = vpack.c.b16 %v1653, %v1651
    %v1854 = vpack.c.b16 %v1654, %v1652
    %v1855 = vpack.c.b16 %v1657, %v1655
    %v1856 = vpack.c.b16 %v1658, %v1656
    %v1857 = vpack.c.b16 %v1661, %v1659
    %v1858 = vpack.c.b16 %v1662, %v1660
    %v1859 = vpack.c.b16 %v1665, %v1663
    %v1860 = vpack.c.b16 %v1666, %v1664
    %v1861 = vpack.c.b16 %v1669, %v1667
    %v1862 = vpack.c.b16 %v1670, %v1668
    %v1863 = vpack.c.b16 %v1673, %v1671
    %v1864 = vpack.c.b16 %v1674, %v1672
    %v1865 = vpack.c.b16 %v1677, %v1675
    %v1866 = vpack.c.b16 %v1678, %v1676
    %v1867 = vpack.c.b16 %v1681, %v1679
    %v1868 = vpack.c.b16 %v1682, %v1680
    %v1869 = vpack.c.b16 %v1685, %v1683
    %v1870 = vpack.c.b16 %v1686, %v1684
    %v1871 = vpack.c.b16 %v1689, %v1687
    %v1872 = vpack.c.b16 %v1690, %v1688
    %v1873 = vpack.c.b16 %v1693, %v1691
    %v1874 = vpack.c.b16 %v1694, %v1692
    %v1875 = vpack.c.b16 %v1697, %v1695
    %v1876 = vpack.c.b16 %v1698, %v1696
    %v1877 = vpack.c.b16 %v1701, %v1699
    %v1878 = vpack.c.b16 %v1702, %v1700
    %v1879 = vpack.c.b16 %v1705, %v1703
    %v1880 = vpack.c.b16 %v1706, %v1704
    %v1881 = vpack.c.b16 %v1709, %v1707
    %v1882 = vpack.c.b16 %v1710, %v1708
    %v1883 = vpack.c.b16 %v1713, %v1711
    %v1884 = vpack.c.b16 %v1714, %v1712
    %v1885 = vpack.c.b16 %v1717, %v1715
    %v1886 = vpack.c.b16 %v1718, %v1716
    %v1887 = vpack.c.b16 %v1721, %v1719
    %v1888 = vpack.c.b16 %v1722, %v1720
    %v1889 = vpack.c.b16 %v1725, %v1723
    %v1890 = vpack.c.b16 %v1726, %v1724
    %v1891 = vpack.c.b16 %v1729, %v1727
    %v1892 = vpack.c.b16 %v1730, %v1728
    %v1893 = vpack.c.b16 %v1733, %v1731
    %v1894 = vpack.c.b16 %v1734, %v1732
    %v1895 = vpack.c.b16 %v1737, %v1735
    %v1896 = vpack.c.b16 %v1738, %v1736
    %v1897 = vpack.c.b16 %v1741, %v1739
    %v1898 = vpack.c.b16 %v1742, %v1740
    %v1899 = vpack.c.b16 %v1745, %v1743
    %v1900 = vpack.c.b16 %v1746, %v1744
    %v1901 = vpack.c.b16 %v1749, %v1747
    %v1902 = vpack.c.b16 %v1750, %v1748
    %v1903 = vpack.c.b16 %v1753, %v1751
    %v1904 = vpack.c.b16 %v1754, %v1752
    %v1905 = vpack.c.b16 %v1757, %v1755
    %v1906 = vpack.c.b16 %v1758, %v1756
    %v1907 = vpack.c.b16 %v1761, %v1759
    %v1908 = vpack.c.b16 %v1762, %v1760
    %v1909 = vpack.c.b16 %v1765, %v1763
    %v1910 = vpack.c.b16 %v1766, %v1764
    %v1911 = vpack.c.b16 %v1769, %v1767
    %v1912 = vpack.c.b16 %v1770, %v1768
    %v1913 = vpack.c.b16 %v1773, %v1771
    %v1914 = vpack.c.b16 %v1774, %v1772
    %v1915 = vpack.c.b16 %v1777, %v1775
    %v1916 = vpack.c.b16 %v1778, %v1776
    %v1917 = vpack.c.b16 %v1781, %v1779
    %v1918 = vpack.c.b16 %v1782, %v1780
    %v1919 = vpack.c.b16 %v1785, %v1783
    %v1920 = vpack.c.b16 %v1786, %v1784
    %v1921 = vpack.c.b16 %v1789, %v1787
    %v1922 = vpack.c.b16 %v1790, %v1788
    %v1923 = vpack.c.b16 %v1793, %v1791
    %v1924 = vpack.c.b16 %v1794, %v1792
    %v1925 = vpack.c.b16 %v1797, %v1795
    %v1926 = vpack.c.b16 %v1798, %v1796
    %2055 = vmatprep.subr.bf16.mxu0 %v1800
    %2056 = vmatpush1.bf16.msra.mxu0 %v1799
    %2057 = vmatprep.subr.bf16.mxu0 %v1802
    %2058 = vmatpush1.bf16.msra.mxu0 %v1801
    %2059 = vmatprep.subr.bf16.mxu0 %v1804
    %2060 = vmatpush1.bf16.msra.mxu0 %v1803
    %2061 = vmatprep.subr.bf16.mxu0 %v1806
    %2062 = vmatpush1.bf16.msra.mxu0 %v1805
    %2063 = vmatprep.subr.bf16.mxu0 %v1808
    %2064 = vmatpush1.bf16.msra.mxu0 %v1807
    %2065 = vmatprep.subr.bf16.mxu0 %v1810
    %2066 = vmatpush1.bf16.msra.mxu0 %v1809
    %2067 = vmatprep.subr.bf16.mxu0 %v1812
    %2068 = vmatpush1.bf16.msra.mxu0 %v1811
    %2069 = vmatprep.subr.bf16.mxu0 %v1814
    %2070 = vmatpush1.bf16.msra.mxu0 %v1813
    %2071 = vmatprep.subr.bf16.mxu0 %v1816
    %2072 = vmatpush1.bf16.msra.mxu0 %v1815
    %2073 = vmatprep.subr.bf16.mxu0 %v1818
    %2074 = vmatpush1.bf16.msra.mxu0 %v1817
    %2075 = vmatprep.subr.bf16.mxu0 %v1820
    %2076 = vmatpush1.bf16.msra.mxu0 %v1819
    %2077 = vmatprep.subr.bf16.mxu0 %v1822
    %2078 = vmatpush1.bf16.msra.mxu0 %v1821
    %2079 = vmatprep.subr.bf16.mxu0 %v1824
    %2080 = vmatpush1.bf16.msra.mxu0 %v1823
    %2081 = vmatprep.subr.bf16.mxu0 %v1826
    %2082 = vmatpush1.bf16.msra.mxu0 %v1825
    %2083 = vmatprep.subr.bf16.mxu0 %v1828
    %2084 = vmatpush1.bf16.msra.mxu0 %v1827
    %2085 = vmatprep.subr.bf16.mxu0 %v1830
    %2086 = vmatpush1.bf16.msra.mxu0 %v1829
    %2087 = vmatprep.mubr.bf16.mxu0 %v1268
    %2088 = vmatmul.mubr.bf16.gmra.mrb[0].mxu0 %v1267
    %v2089 = vpop.f32.mrb[0].mxu0
    %v2090 = vadd.f32 %v1408, %v2089
    %v2091 = vpop.f32.mrb[0].mxu0
    %v2092 = vadd.f32 %v1412, %v2091
    %v2093 = vpop.f32.mrb[0].mxu0
    %v2094 = vadd.f32 %v1408, %v2093
    %v2095 = vpop.f32.mrb[0].mxu0
    %v2096 = vadd.f32 %v1412, %v2095
    %2097 = vdwg.mxu0
    %2098 = vmatprep.subr.bf16.mxu0 %v1832
    %2099 = vmatpush1.bf16.msra.mxu0 %v1831
    %2100 = vmatprep.subr.bf16.mxu0 %v1834
    %2101 = vmatpush1.bf16.msra.mxu0 %v1833
    %2102 = vmatprep.subr.bf16.mxu0 %v1836
    %2103 = vmatpush1.bf16.msra.mxu0 %v1835
    %2104 = vmatprep.subr.bf16.mxu0 %v1838
    %2105 = vmatpush1.bf16.msra.mxu0 %v1837
    %2106 = vmatprep.subr.bf16.mxu0 %v1840
    %2107 = vmatpush1.bf16.msra.mxu0 %v1839
    %2108 = vmatprep.subr.bf16.mxu0 %v1842
    %2109 = vmatpush1.bf16.msra.mxu0 %v1841
    %2110 = vmatprep.subr.bf16.mxu0 %v1844
    %2111 = vmatpush1.bf16.msra.mxu0 %v1843
    %2112 = vmatprep.subr.bf16.mxu0 %v1846
    %2113 = vmatpush1.bf16.msra.mxu0 %v1845
    %2114 = vmatprep.subr.bf16.mxu0 %v1848
    %2115 = vmatpush1.bf16.msra.mxu0 %v1847
    %2116 = vmatprep.subr.bf16.mxu0 %v1850
    %2117 = vmatpush1.bf16.msra.mxu0 %v1849
    %2118 = vmatprep.subr.bf16.mxu0 %v1852
    %2119 = vmatpush1.bf16.msra.mxu0 %v1851
    %2120 = vmatprep.subr.bf16.mxu0 %v1854
    %2121 = vmatpush1.bf16.msra.mxu0 %v1853
    %2122 = vmatprep.subr.bf16.mxu0 %v1856
    %2123 = vmatpush1.bf16.msra.mxu0 %v1855
    %2124 = vmatprep.subr.bf16.mxu0 %v1858
    %2125 = vmatpush1.bf16.msra.mxu0 %v1857
    %2126 = vmatprep.subr.bf16.mxu0 %v1860
    %2127 = vmatpush1.bf16.msra.mxu0 %v1859
    %2128 = vmatprep.subr.bf16.mxu0 %v1862
    %2129 = vmatpush1.bf16.msra.mxu0 %v1861
    %2130 = vmatprep.mubr.bf16.mxu0 %v1270
    %2131 = vmatmul.mubr.bf16.gmra.mrb[0].mxu0 %v1269
    %v2132 = vpop.f32.mrb[0].mxu0
    %v2133 = vadd.f32 %v2090, %v2132
    %v2134 = vpop.f32.mrb[0].mxu0
    %v2135 = vadd.f32 %v2092, %v2134
    %v2136 = vpop.f32.mrb[0].mxu0
    %v2137 = vadd.f32 %v2094, %v2136
    %v2138 = vpop.f32.mrb[0].mxu0
    %v2139 = vadd.f32 %v2096, %v2138
    %2140 = vdwg.mxu0
    %2141 = vmatprep.subr.bf16.mxu0 %v1864
    %2142 = vmatpush1.bf16.msra.mxu0 %v1863
    %2143 = vmatprep.subr.bf16.mxu0 %v1866
    %2144 = vmatpush1.bf16.msra.mxu0 %v1865
    %2145 = vmatprep.subr.bf16.mxu0 %v1868
    %2146 = vmatpush1.bf16.msra.mxu0 %v1867
    %2147 = vmatprep.subr.bf16.mxu0 %v1870
    %2148 = vmatpush1.bf16.msra.mxu0 %v1869
    %2149 = vmatprep.subr.bf16.mxu0 %v1872
    %2150 = vmatpush1.bf16.msra.mxu0 %v1871
    %2151 = vmatprep.subr.bf16.mxu0 %v1874
    %2152 = vmatpush1.bf16.msra.mxu0 %v1873
    %2153 = vmatprep.subr.bf16.mxu0 %v1876
    %2154 = vmatpush1.bf16.msra.mxu0 %v1875
    %2155 = vmatprep.subr.bf16.mxu0 %v1878
    %2156 = vmatpush1.bf16.msra.mxu0 %v1877
    %2157 = vmatprep.subr.bf16.mxu0 %v1880
    %2158 = vmatpush1.bf16.msra.mxu0 %v1879
    %2159 = vmatprep.subr.bf16.mxu0 %v1882
    %2160 = vmatpush1.bf16.msra.mxu0 %v1881
    %2161 = vmatprep.subr.bf16.mxu0 %v1884
    %2162 = vmatpush1.bf16.msra.mxu0 %v1883
    %2163 = vmatprep.subr.bf16.mxu0 %v1886
    %2164 = vmatpush1.bf16.msra.mxu0 %v1885
    %2165 = vmatprep.subr.bf16.mxu0 %v1888
    %2166 = vmatpush1.bf16.msra.mxu0 %v1887
    %2167 = vmatprep.subr.bf16.mxu0 %v1890
    %2168 = vmatpush1.bf16.msra.mxu0 %v1889
    %2169 = vmatprep.subr.bf16.mxu0 %v1892
    %2170 = vmatpush1.bf16.msra.mxu0 %v1891
    %2171 = vmatprep.subr.bf16.mxu0 %v1894
    %2172 = vmatpush1.bf16.msra.mxu0 %v1893
    %2173 = vmatprep.mubr.bf16.mxu0 %v1272
    %2174 = vmatmul.mubr.bf16.gmra.mrb[0].mxu0 %v1271
    %v2175 = vpop.f32.mrb[0].mxu0
    %v2176 = vadd.f32 %v2133, %v2175
    %v2177 = vpop.f32.mrb[0].mxu0
    %v2178 = vadd.f32 %v2135, %v2177
    %v2179 = vpop.f32.mrb[0].mxu0
    %v2180 = vadd.f32 %v2137, %v2179
    %v2181 = vpop.f32.mrb[0].mxu0
    %v2182 = vadd.f32 %v2139, %v2181
    %2183 = vdwg.mxu0
    %2184 = vmatprep.subr.bf16.mxu0 %v1896
    %2185 = vmatpush1.bf16.msra.mxu0 %v1895
    %2186 = vmatprep.subr.bf16.mxu0 %v1898
    %2187 = vmatpush1.bf16.msra.mxu0 %v1897
    %2188 = vmatprep.subr.bf16.mxu0 %v1900
    %2189 = vmatpush1.bf16.msra.mxu0 %v1899
    %2190 = vmatprep.subr.bf16.mxu0 %v1902
    %2191 = vmatpush1.bf16.msra.mxu0 %v1901
    %2192 = vmatprep.subr.bf16.mxu0 %v1904
    %2193 = vmatpush1.bf16.msra.mxu0 %v1903
    %2194 = vmatprep.subr.bf16.mxu0 %v1906
    %2195 = vmatpush1.bf16.msra.mxu0 %v1905
    %2196 = vmatprep.subr.bf16.mxu0 %v1908
    %2197 = vmatpush1.bf16.msra.mxu0 %v1907
    %2198 = vmatprep.subr.bf16.mxu0 %v1910
    %2199 = vmatpush1.bf16.msra.mxu0 %v1909
    %2200 = vmatprep.subr.bf16.mxu0 %v1912
    %2201 = vmatpush1.bf16.msra.mxu0 %v1911
    %2202 = vmatprep.subr.bf16.mxu0 %v1914
    %2203 = vmatpush1.bf16.msra.mxu0 %v1913
    %2204 = vmatprep.subr.bf16.mxu0 %v1916
    %2205 = vmatpush1.bf16.msra.mxu0 %v1915
    %2206 = vmatprep.subr.bf16.mxu0 %v1918
    %2207 = vmatpush1.bf16.msra.mxu0 %v1917
    %2208 = vmatprep.subr.bf16.mxu0 %v1920
    %2209 = vmatpush1.bf16.msra.mxu0 %v1919
    %2210 = vmatprep.subr.bf16.mxu0 %v1922
    %2211 = vmatpush1.bf16.msra.mxu0 %v1921
    %2212 = vmatprep.subr.bf16.mxu0 %v1924
    %2213 = vmatpush1.bf16.msra.mxu0 %v1923
    %2214 = vmatprep.subr.bf16.mxu0 %v1926
    %2215 = vmatpush1.bf16.msra.mxu0 %v1925
    %2216 = vmatprep.mubr.bf16.mxu0 %v1274
    %2217 = vmatmul.mubr.bf16.gmra.mrb[0].mxu0 %v1273
    %v2218 = vpop.f32.mrb[0].mxu0
    %v2219 = vadd.f32 %v2176, %v2218
    %v2220 = vpop.f32.mrb[0].mxu0
    %v2221 = vadd.f32 %v2178, %v2220
    %v2222 = vpop.f32.mrb[0].mxu0
    %v2223 = vadd.f32 %v2180, %v2222
    %v2224 = vpop.f32.mrb[0].mxu0
    %v2225 = vadd.f32 %v2182, %v2224
    %2226 = vdwg.mxu0
    %v2227 = vmax.f32 %v2219, 0.0
    %v2228 = vmax.f32 %v2221, 0.0
    %v2229 = vmax.f32 %v2223, 0.0
    %v2230 = vmax.f32 %v2225, 0.0
    %v2231 = vpack.c.bf16 %v2229, %v2227
    %v2232 = vpack.c.bf16 %v2230, %v2228
    %v2233 = vld [vmem:[%s7] sm:$0xf]
    %v2234 = vld [vmem:[%s7 + $0x4] sm:$0xf]
    %v2235 = vld [vmem:[%s7 + $0x8] sm:$0xf]
    %v2236 = vld [vmem:[%s7 + $0xc] sm:$0xf]
    %v2237 = vld [vmem:[%s7 + $0x10] sm:$0xf]
    %v2238 = vld [vmem:[%s7 + $0x14] sm:$0xf]
    %v2239 = vld [vmem:[%s7 + $0x18] sm:$0xf]
    %v2240 = vld [vmem:[%s7 + $0x1c] sm:$0xf]
    %v2241 = vld [vmem:[%s7 + $0x20] sm:$0xf]
    %v2242 = vld [vmem:[%s7 + $0x24] sm:$0xf]
    %v2243 = vld [vmem:[%s7 + $0x28] sm:$0xf]
    %v2244 = vld [vmem:[%s7 + $0x2c] sm:$0xf]
    %v2245 = vld [vmem:[%s7 + $0x30] sm:$0xf]
    %v2246 = vld [vmem:[%s7 + $0x34] sm:$0xf]
    %v2247 = vld [vmem:[%s7 + $0x38] sm:$0xf]
    %v2248 = vld [vmem:[%s7 + $0x3c] sm:$0xf]
    %v2249 = vld [vmem:[%s7 + $0x40] sm:$0xf]
    %v2250 = vld [vmem:[%s7 + $0x44] sm:$0xf]
    %v2251 = vld [vmem:[%s7 + $0x48] sm:$0xf]
    %v2252 = vld [vmem:[%s7 + $0x4c] sm:$0xf]
    %v2253 = vld [vmem:[%s7 + $0x50] sm:$0xf]
    %v2254 = vld [vmem:[%s7 + $0x54] sm:$0xf]
    %v2255 = vld [vmem:[%s7 + $0x58] sm:$0xf]
    %v2256 = vld [vmem:[%s7 + $0x5c] sm:$0xf]
    %v2257 = vld [vmem:[%s7 + $0x60] sm:$0xf]
    %v2258 = vld [vmem:[%s7 + $0x64] sm:$0xf]
    %v2259 = vld [vmem:[%s7 + $0x68] sm:$0xf]
    %v2260 = vld [vmem:[%s7 + $0x6c] sm:$0xf]
    %v2261 = vld [vmem:[%s7 + $0x70] sm:$0xf]
    %v2262 = vld [vmem:[%s7 + $0x74] sm:$0xf]
    %v2263 = vld [vmem:[%s7 + $0x78] sm:$0xf]
    %v2264 = vld [vmem:[%s7 + $0x7c] sm:$0xf]
    %v2265 = vld [vmem:[%s8] sm:$0x1]
    %v2267 = vlaneseq
    %v2268 = vshrl.u32 %v2267, 7
    %v2269 = vsub.s32 0, %v2268
    %v2270 = vrot.slane %v2265, %v2269
    %v2304 = vunpack.c.l.b16 %v2233
    %v2305 = vunpack.c.l.b16 %v2234
    %v2306 = vunpack.c.l.b16 %v2235
    %v2307 = vunpack.c.l.b16 %v2236
    %v2308 = vunpack.c.l.b16 %v2237
    %v2309 = vunpack.c.l.b16 %v2238
    %v2310 = vunpack.c.l.b16 %v2239
    %v2311 = vunpack.c.l.b16 %v2240
    %v2312 = vunpack.c.l.b16 %v2241
    %v2313 = vunpack.c.l.b16 %v2242
    %v2314 = vunpack.c.l.b16 %v2243
    %v2315 = vunpack.c.l.b16 %v2244
    %v2316 = vunpack.c.l.b16 %v2245
    %v2317 = vunpack.c.l.b16 %v2246
    %v2318 = vunpack.c.l.b16 %v2247
    %v2319 = vunpack.c.l.b16 %v2248
    %v2320 = vunpack.c.l.b16 %v2249
    %v2321 = vunpack.c.l.b16 %v2250
    %v2322 = vunpack.c.l.b16 %v2251
    %v2323 = vunpack.c.l.b16 %v2252
    %v2324 = vunpack.c.l.b16 %v2253
    %v2325 = vunpack.c.l.b16 %v2254
    %v2326 = vunpack.c.l.b16 %v2255
    %v2327 = vunpack.c.l.b16 %v2256
    %v2328 = vunpack.c.l.b16 %v2257
    %v2329 = vunpack.c.l.b16 %v2258
    %v2330 = vunpack.c.l.b16 %v2259
    %v2331 = vunpack.c.l.b16 %v2260
    %v2332 = vunpack.c.l.b16 %v2261
    %v2333 = vunpack.c.l.b16 %v2262
    %v2334 = vunpack.c.l.b16 %v2263
    %v2335 = vunpack.c.l.b16 %v2264
    %v2336 = vpack.c.b16 %v2305, %v2304
    %v2337 = vpack.c.b16 %v2307, %v2306
    %v2338 = vpack.c.b16 %v2309, %v2308
    %v2339 = vpack.c.b16 %v2311, %v2310
    %v2340 = vpack.c.b16 %v2313, %v2312
    %v2341 = vpack.c.b16 %v2315, %v2314
    %v2342 = vpack.c.b16 %v2317, %v2316
    %v2343 = vpack.c.b16 %v2319, %v2318
    %v2344 = vpack.c.b16 %v2321, %v2320
    %v2345 = vpack.c.b16 %v2323, %v2322
    %v2346 = vpack.c.b16 %v2325, %v2324
    %v2347 = vpack.c.b16 %v2327, %v2326
    %v2348 = vpack.c.b16 %v2329, %v2328
    %v2349 = vpack.c.b16 %v2331, %v2330
    %v2350 = vpack.c.b16 %v2333, %v2332
    %v2351 = vpack.c.b16 %v2335, %v2334
    %2368 = vmatprep.subr.bf16.mxu0 0
    %2369 = vmatpush1.bf16.msra.mxu0 %v2336
    %2370 = vmatprep.subr.bf16.mxu0 0
    %2371 = vmatpush1.bf16.msra.mxu0 %v2337
    %2372 = vmatprep.subr.bf16.mxu0 0
    %2373 = vmatpush1.bf16.msra.mxu0 %v2338
    %2374 = vmatprep.subr.bf16.mxu0 0
    %2375 = vmatpush1.bf16.msra.mxu0 %v2339
    %2376 = vmatprep.subr.bf16.mxu0 0
    %2377 = vmatpush1.bf16.msra.mxu0 %v2340
    %2378 = vmatprep.subr.bf16.mxu0 0
    %2379 = vmatpush1.bf16.msra.mxu0 %v2341
    %2380 = vmatprep.subr.bf16.mxu0 0
    %2381 = vmatpush1.bf16.msra.mxu0 %v2342
    %2382 = vmatprep.subr.bf16.mxu0 0
    %2383 = vmatpush1.bf16.msra.mxu0 %v2343
    %2384 = vmatprep.subr.bf16.mxu0 0
    %2385 = vmatpush1.bf16.msra.mxu0 %v2344
    %2386 = vmatprep.subr.bf16.mxu0 0
    %2387 = vmatpush1.bf16.msra.mxu0 %v2345
    %2388 = vmatprep.subr.bf16.mxu0 0
    %2389 = vmatpush1.bf16.msra.mxu0 %v2346
    %2390 = vmatprep.subr.bf16.mxu0 0
    %2391 = vmatpush1.bf16.msra.mxu0 %v2347
    %2392 = vmatprep.subr.bf16.mxu0 0
    %2393 = vmatpush1.bf16.msra.mxu0 %v2348
    %2394 = vmatprep.subr.bf16.mxu0 0
    %2395 = vmatpush1.bf16.msra.mxu0 %v2349
    %2396 = vmatprep.subr.bf16.mxu0 0
    %2397 = vmatpush1.bf16.msra.mxu0 %v2350
    %2398 = vmatprep.subr.bf16.mxu0 0
    %2399 = vmatpush1.bf16.msra.mxu0 %v2351
    %2400 = vmatprep.mubr.bf16.mxu0 %v2232
    %2401 = vmatmul.mubr.bf16.gmra.mrb[0].mxu0 %v2231
    %v2402 = vpop.f32.mrb[0].mxu0
    %v2403 = vadd.f32 %v2270, %v2402
    %v2404 = vpop.f32.mrb[0].mxu0
    %v2405 = vpop.f32.mrb[0].mxu0
    %v2406 = vadd.f32 %v2270, %v2405
    %v2407 = vpop.f32.mrb[0].mxu0
    %2408 = vdwg.mxu0
    %2409 = vst [vmem:[#allocation5] sm:$0xff] %v2403
    %2410 = vst [vmem:[#allocation5 + $0x8] sm:$0xff] %v2406
    // Predicated region
    $region42: #{tpu_custom_call.1} parent=1 // pred_check
      _
    $region43: #{tpu_custom_call.1} parent=1 // pred_check_branch
      %2412 = sbr.rel (0) target = $region45
    $region44: #{tpu_custom_call.1} parent=1 // pred_region
      %s2414 = ssub.s32 256, 256
      %2415 = vsyncadd [#allocation4], %s2414
      %s2416 = sshll.u32 [#allocation5], 4
      %s2417 = int_to_ptr.vmem [resolvable:$true] %s2416
      %2422 = dma.vmem_to_hbm [thread:$0]  %s2417, 256, %s9, [#allocation4], 128, 128, 8
    $region45: #{tpu_custom_call.1} parent=1 // pred_fallthru
      _
    // Predicated region
    $region46: #{tpu_custom_call.1} parent=1 // pred_check
      _
    $region47: #{tpu_custom_call.1} parent=1 // pred_check_branch
      %2424 = sbr.rel (0) target = $region49
    $region48: #{tpu_custom_call.1} parent=1 // pred_region
      %s2426 = ssub.s32 256, 256
      %2427 = vsyncadd [#allocation7], %s2426
      %s2428 = sshll.u32 [#allocation6], 4
      %s2429 = int_to_ptr.vmem [resolvable:$true] %s2428
      %2434 = dma.vmem_to_hbm [thread:$0]  %s2429, 256, %s10, [#allocation7], 128, 128, 8
    $region49: #{tpu_custom_call.1} parent=1 // pred_fallthru
      _
    // Predicated region
    $region50: #{tpu_custom_call.1} parent=1 // pred_check
      _
    $region51: #{tpu_custom_call.1} parent=1 // pred_check_branch
      %2436 = sbr.rel (0) target = $region53
    $region52: #{tpu_custom_call.1} parent=1 // pred_region
      %2437 = dma.done [#allocation4], 256
    $region53: #{tpu_custom_call.1} parent=1 // pred_fallthru
      _
    // Predicated region
    $region54: #{tpu_custom_call.1} parent=1 // pred_check
      _
    $region55: #{tpu_custom_call.1} parent=1 // pred_check_branch
      %2439 = sbr.rel (0) target = $region57
    $region56: #{tpu_custom_call.1} parent=1 // pred_region
      %2440 = dma.done [#allocation7], 256
    $region57: #{tpu_custom_call.1} parent=1 // pred_fallthru
      _
    %2441 = vsyncpa [#allocation3], 1
    %2442 = vsyncpa [#allocation4], 1
    %2443 = vsyncpa [#allocation7], 1

</llo_original>
